<compile_context>
chip_gen: v7x
topology: tpu7x:2x2x1
jax: 0.10.0
libtpu: 0.0.40
codegen_flags: <defaults>
</compile_context>

<pallas_src>
import functools
from math import sqrt

import jax
import jax.numpy as jnp
from jax.experimental import pallas as pl
from jax.experimental.pallas import tpu as pltpu

LN_EPS = 1e-5                     # torch.nn.LayerNorm default eps


def _default_vmem_limit():
    """~75% of per-core physical VMEM, capped at 100 MiB (≈96 MiB on v5e/v6e's 128 MiB,
    ≈48 MiB on v7x's 64 MiB). Conservative 32 MiB fallback if the query is unavailable."""
    try:
        cap = int(pltpu.get_tpu_info().vmem_capacity_bytes)
        return int(min(100 * 1024 * 1024, (cap * 3) // 4))
    except Exception:
        return 32 * 1024 * 1024


def _fast_recip(x):
    """Approx reciprocal rides the EUP slot (nearly free) instead of a VALU broadcast divide."""
    if hasattr(pl, "reciprocal"):
        return pl.reciprocal(x, approx=True)
    return 1.0 / x


# --------------------------------------------------------------------------------------
# Kernel 1: one (batch, query-tile) block — fused QKV projection (all heads) + attention
# --------------------------------------------------------------------------------------
def _attention_kernel(dec_ref, mem_ref, wq_ref, bq_ref, wkv_ref, bkv_ref,
                      ctx_ref, *maybe_attn_ref, scale, n_head, d_model):
    """All heads per grid step: one (tq,D)@(D,H*D) matmul for Q, one (Sk,D)@(D,2*H*D)
    matmul for [K|V], then a static in-kernel loop over heads. MXU operands stay in the
    chosen MXU dtype with f32 accumulation; softmax stays f32 (v5e has no bf16 VPU/EUP).
    The per-head context is computed already transposed ((D, tq), contracting Sk of V
    with Sk of P directly on the MXU), so the store is lane-dense along Sq and the
    wrapper-side head-concat scramble is a pure reshape."""
    attn_ref = maybe_attn_ref[0] if maybe_attn_ref else None
    H, D = n_head, d_model

    x_dec = dec_ref[0]                          # (tq, D)  mxu dtype
    x_mem = mem_ref[0]                          # (Sk, D)
    mxu = x_dec.dtype

    q_all = jnp.dot(x_dec, wq_ref[...], preferred_element_type=jnp.float32)
    q_all = (q_all + bq_ref[...]) * scale       # torch: query / sqrt(dim_key), dim_key == d_model
    kv_all = jnp.dot(x_mem, wkv_ref[...], preferred_element_type=jnp.float32)
    kv_all = kv_all + bkv_ref[...]              # first H*D lanes = K, next H*D lanes = V

    for h in range(H):                          # static unroll over heads (H is small)
        q_h = q_all[:, h * D:(h + 1) * D].astype(mxu)
        k_h = kv_all[:, h * D:(h + 1) * D].astype(mxu)
        v_h = kv_all[:, (H + h) * D:(H + h + 1) * D].astype(mxu)

        # scores = q_h @ k_h^T  (contract the head dim of both operands)
        s = jax.lax.dot_general(q_h, k_h, (((1,), (1,)), ((), ())),
                                preferred_element_type=jnp.float32)      # (tq, Sk) f32
        s = s - jnp.max(s, axis=-1, keepdims=True)
        p = jnp.exp(s)
        p = p * _fast_recip(jnp.sum(p, axis=-1, keepdims=True))          # EUP recip + VPU mul

        if attn_ref is not None:
            attn_ref[0, h] = p.astype(attn_ref.dtype)

        # ctx^T = (p @ v_h)^T computed directly on the MXU: contract Sk of V with Sk of P.
        ctx_t = jax.lax.dot_general(v_h, p.astype(mxu), (((0,), (1,)), ((), ())),
                                    preferred_element_type=jnp.float32)  # (D, tq)
        ctx_ref[0, h] = ctx_t.astype(ctx_ref.dtype)


# --------------------------------------------------------------------------------------
# Kernel 2: output projection + bias + residual + LayerNorm on lane-dense packed tiles
# --------------------------------------------------------------------------------------
def _proj_residual_ln_kernel(y_ref, res_ref, wp_ref, bp_ref, mavg_ref,
                             gamma_ref, beta_ref, o_ref):
    """P = 128 // d_model logical rows are packed into each 128-lane row, so the matmul
    output, every VPU op and the final store are fully lane-dense (no masked vst).
    Per-logical-row mean / E[x^2] come from a block-diagonal averaging matmul;
    var = E[x^2] - mean^2 (one-pass, clamped at 0)."""
    y = jnp.dot(y_ref[...], wp_ref[...], preferred_element_type=jnp.float32)
    y = y + bp_ref[...] + res_ref[...]                       # bias + residual, f32

    mean = jnp.dot(y, mavg_ref[...], preferred_element_type=jnp.float32)
    ex2 = jnp.dot(y * y, mavg_ref[...], preferred_element_type=jnp.float32)
    var = jnp.maximum(ex2 - mean * mean, 0.0)

    y_n = (y - mean) * jax.lax.rsqrt(var + LN_EPS)
    o_ref[...] = (y_n * gamma_ref[...] + beta_ref[...]).astype(o_ref.dtype)


# --------------------------------------------------------------------------------------
# One-time parameter preparation (do at model init, not per forward call)
# --------------------------------------------------------------------------------------
def prepare_mha_params(wq, bq, wk, bk, wv, bv, wp, bp, gamma, beta, *,
                       n_head, mxu_dtype=jnp.bfloat16):
    """Hoists all constant layout transforms out of the forward path:
    weight casts, the [Wk|Wv] concat, the block-diagonal projection / averaging
    matrices for the packed LayerNorm kernel, and the tiled bias/gamma/beta."""
    f32 = jnp.float32
    D = wq.shape[0]
    H = n_head
    HD = H * D
    assert wq.shape == (D, HD) and wk.shape == (D, HD) and wv.shape == (D, HD)
    assert wp.shape == (HD, D)

    P = 128 // D if (D < 128 and 128 % D == 0) else 1
    eye_p = jnp.eye(P, dtype=f32)

    return dict(
        n_head=H, d_model=D, P=P, mxu_dtype=mxu_dtype,
        # kernel 1: fused projection weights (all heads), MXU dtype; biases stay f32
        wq=jnp.asarray(wq, f32).astype(mxu_dtype),                         # (D, H*D)
        bq=jnp.asarray(bq, f32).reshape(1, HD),
        wkv=jnp.concatenate([jnp.asarray(wk, f32),
                             jnp.asarray(wv, f32)], axis=1).astype(mxu_dtype),  # (D, 2*H*D)
        bkv=jnp.concatenate([jnp.asarray(bk, f32),
                             jnp.asarray(bv, f32)]).reshape(1, 2 * HD),
        # kernel 2: block-diagonal projection + LayerNorm helpers on packed rows
        wp_blk=jnp.kron(eye_p, jnp.asarray(wp, f32)).astype(mxu_dtype),    # (P*HD, P*D)
        mavg=jnp.kron(eye_p, jnp.full((D, D), 1.0 / D, dtype=f32)),        # per-group averaging
        bp=jnp.tile(jnp.asarray(bp, f32), P).reshape(1, P * D),
        gamma=jnp.tile(jnp.asarray(gamma, f32), P).reshape(1, P * D),
        beta=jnp.tile(jnp.asarray(beta, f32), P).reshape(1, P * D),
    )


# --------------------------------------------------------------------------------------
# Forward wrapper
# --------------------------------------------------------------------------------------
def multi_head_attention(memory, decoder_output, params, *,
                         q_block=1024, row_tile=4096,
                         return_attention=True, attn_dtype=None,
                         vmem_limit_bytes=None):
    """memory: [B, Sk, D]; decoder_output: [B, Sq, D]; params: prepare_mha_params(...).
    Returns (layer_norm_output [B, Sq, D], attention [B, H, Sq, Sk]) — attention is
    omitted when return_attention=False (skips its HBM writeback entirely)."""
    f32 = jnp.float32
    H = params["n_head"]
    D = params["d_model"]
    P = params["P"]
    mxu_dtype = params["mxu_dtype"]
    HD = H * D

    B, Sq, _ = decoder_output.shape
    Sk = memory.shape[1]
    scale = 1.0 / sqrt(D)
    if attn_dtype is None:
        attn_dtype = mxu_dtype                      # bf16 by default: halves attn writeback
    if vmem_limit_bytes is None:
        vmem_limit_bytes = _default_vmem_limit()

    # ---------------- kernel 1: per-(batch, query-tile) fused multi-head attention ----------------
    q_block = max(128, (q_block // 128) * 128)      # non-full tiles must be lane-aligned (128)
    if Sq <= q_block:
        tq, Sq_pad = Sq, Sq                         # single full-extent tile, no padding
    else:
        tq = q_block
        Sq_pad = pl.cdiv(Sq, tq) * tq               # zero-pad query rows instead of asserting

    dec_in = decoder_output.astype(mxu_dtype)
    if Sq_pad != Sq:
        dec_in = jnp.pad(dec_in, ((0, 0), (0, Sq_pad - Sq), (0, 0)))
    mem_in = memory.astype(mxu_dtype)

    n_qt = Sq_pad // tq
    out_shape = [jax.ShapeDtypeStruct((B, H, D, Sq_pad), mxu_dtype)]   # ctx pre-transposed
    out_specs = [pl.BlockSpec((1, H, D, tq), lambda b, qi: (b, 0, 0, qi))]
    if return_attention:
        out_shape.append(jax.ShapeDtypeStruct((B, H, Sq_pad, Sk), attn_dtype))
        out_specs.append(pl.BlockSpec((1, H, tq, Sk), lambda b, qi: (b, 0, qi, 0)))

    kernel1 = functools.partial(_attention_kernel, scale=scale, n_head=H, d_model=D)
    outs = pl.pallas_call(
        kernel1,
        out_shape=tuple(out_shape),
        grid_spec=pltpu.PrefetchScalarGridSpec(
            num_scalar_prefetch=0,
            grid=(B, n_qt),                          # independent blocks -> megacore sharding
            in_specs=[
                pl.BlockSpec((1, tq, D), lambda b, qi: (b, qi, 0)),   # decoder rows (query side)
                pl.BlockSpec((1, Sk, D), lambda b, qi: (b, 0, 0)),    # memory rows (key/value side)
                pl.BlockSpec((D, HD), lambda b, qi: (0, 0)),          # Wq (all heads, resident)
                pl.BlockSpec((1, HD), lambda b, qi: (0, 0)),          # bq
                pl.BlockSpec((D, 2 * HD), lambda b, qi: (0, 0)),      # [Wk | Wv] (resident)
                pl.BlockSpec((1, 2 * HD), lambda b, qi: (0, 0)),      # [bk | bv]
            ],
            out_specs=list(out_specs),
        ),
        compiler_params=pltpu.CompilerParams(
            dimension_semantics=("parallel", "parallel"),
            vmem_limit_bytes=vmem_limit_bytes,
        ),
    )(dec_in, mem_in, params["wq"], params["bq"], params["wkv"], params["bkv"])

    if return_attention:
        ctx_t, attn = outs
    else:
        ctx_t = outs[0] if isinstance(outs, (tuple, list)) else outs
        attn = None

    if Sq_pad != Sq:
        ctx_t = ctx_t[..., :Sq]
        if attn is not None:
            attn = attn[:, :, :Sq, :]

    # torch: x = ctx.transpose(2,3).contiguous().view(B, -1, H*D).
    # ctx_t is already (B, H, D, Sq), so the scramble is a pure reshape (no HBM transpose).
    y2 = ctx_t.reshape(B * Sq, HD)

    # ---------------- kernel 2: projection + residual + LayerNorm (lane-dense, packed) ----------------
    rows = B * Sq
    unit = 8 * P                                        # keeps the packed tile a multiple of 8 sublanes
    row_tile = max(unit, (min(row_tile, pl.cdiv(rows, unit) * unit) // unit) * unit)
    rows_pad = pl.cdiv(rows, row_tile) * row_tile       # zero-pad rows instead of asserting

    res2 = decoder_output.astype(f32).reshape(rows, D)
    if rows_pad != rows:
        y2 = jnp.pad(y2, ((0, rows_pad - rows), (0, 0)))
        res2 = jnp.pad(res2, ((0, rows_pad - rows), (0, 0)))

    y_p = y2.reshape(rows_pad // P, P * HD)             # row-major repack, same bytes
    res_p = res2.reshape(rows_pad // P, P * D)
    tm = row_tile // P                                  # packed rows per grid step (>= 8)

    out_p = pl.pallas_call(
        _proj_residual_ln_kernel,
        out_shape=jax.ShapeDtypeStruct((rows_pad // P, P * D), f32),
        grid_spec=pltpu.PrefetchScalarGridSpec(
            num_scalar_prefetch=0,
            grid=(rows_pad // row_tile,),
            in_specs=[
                pl.BlockSpec((tm, P * HD), lambda i: (i, 0)),      # packed attention-output rows
                pl.BlockSpec((tm, P * D), lambda i: (i, 0)),       # packed residual rows
                pl.BlockSpec((P * HD, P * D), lambda i: (0, 0)),   # resident block-diag projection W
                pl.BlockSpec((1, P * D), lambda i: (0, 0)),        # bias (tiled)
                pl.BlockSpec((P * D, P * D), lambda i: (0, 0)),    # group-averaging matrix
                pl.BlockSpec((1, P * D), lambda i: (0, 0)),        # gamma (tiled)
                pl.BlockSpec((1, P * D), lambda i: (0, 0)),        # beta (tiled)
            ],
            out_specs=pl.BlockSpec((tm, P * D), lambda i: (i, 0)),
        ),
        compiler_params=pltpu.CompilerParams(
            dimension_semantics=("parallel",),
            vmem_limit_bytes=vmem_limit_bytes,
        ),
    )(y_p, res_p, params["wp_blk"], params["bp"], params["mavg"],
      params["gamma"], params["beta"])

    out = out_p.reshape(rows_pad, D)[:rows].reshape(B, Sq, D).astype(decoder_output.dtype)
    if return_attention:
        return out, attn
    return out


# --------------------------------------------------------------------------------------
# Pure-jnp reference (transcription of the torch module, eval mode, mask=None)
# --------------------------------------------------------------------------------------
def reference_mha(memory, decoder_output, wq, bq, wk, bk, wv, bv,
                  wp, bp, gamma, beta, *, n_head):
    B, Sq, D = decoder_output.shape
    Sk = memory.shape[1]
    H = n_head
    q = (decoder_output @ wq + bq).reshape(B, Sq, H, D).transpose(0, 2, 1, 3)
    k = (memory @ wk + bk).reshape(B, Sk, H, D).transpose(0, 2, 1, 3)
    v = (memory @ wv + bv).reshape(B, Sk, H, D).transpose(0, 2, 1, 3)
    scores = jnp.einsum('bhqd,bhkd->bhqk', q / sqrt(D), k)
    attn = jax.nn.softmax(scores, axis=-1)
    ctx = jnp.einsum('bhqk,bhkd->bhqd', attn, v)
    x = jnp.transpose(ctx, (0, 1, 3, 2)).reshape(B, Sq, H * D)   # torch: transpose(2,3).view
    x = x @ wp + bp
    x = x + decoder_output
    mean = jnp.mean(x, axis=-1, keepdims=True)
    var = jnp.mean((x - mean) ** 2, axis=-1, keepdims=True)
    return (x - mean) / jnp.sqrt(var + LN_EPS) * gamma + beta, attn


if __name__ == "__main__":
    # Small shapes consistent with the module: d_model=32, n_head=3, batch=2, seq=8.
    B, S, D, H = 2, 8, 32, 3

    key = jax.random.PRNGKey(0)
    ks = jax.random.split(key, 10)

    memory = jax.random.normal(ks[0], (B, S, D), dtype=jnp.float32)
    decoder_output = jax.random.normal(ks[1], (B, S, D), dtype=jnp.float32)

    def lin(kw, kb, fan_in, fan_out):   # deterministic synthetic params, math layout [in, out]
        w = jax.random.normal(kw, (fan_in, fan_out), jnp.float32) / jnp.sqrt(float(fan_in))
        b = jax.random.normal(kb, (fan_out,), jnp.float32) * 0.02
        return w, b

    wq, bq = lin(ks[2], ks[3], D, H * D)
    wk, bk = lin(ks[4], ks[5], D, H * D)
    wv, bv = lin(ks[6], ks[7], D, H * D)
    wp, bp = lin(ks[8], ks[9], H * D, D)
    gamma = jnp.ones((D,), jnp.float32)
    beta = jnp.zeros((D,), jnp.float32)

    ref_out, ref_attn = reference_mha(memory, decoder_output, wq, bq, wk, bk, wv, bv,
                                      wp, bp, gamma, beta, n_head=H)

    # f32 MXU operands: tighter check against the reference.
    params32 = prepare_mha_params(wq, bq, wk, bk, wv, bv, wp, bp, gamma, beta,
                                  n_head=H, mxu_dtype=jnp.float32)
    out32, attn32 = multi_head_attention(memory, decoder_output, params32)
    out32 = jax.block_until_ready(out32)
    assert out32.shape == (B, S, D)
    assert attn32.shape == (B, H, S, S)
    assert jnp.allclose(attn32.astype(jnp.float32), ref_attn, atol=5e-2, rtol=5e-2), \
        "attention mismatch (f32)"
    assert jnp.allclose(out32, ref_out, atol=5e-2, rtol=5e-2), "output mismatch (f32)"

    # Default bf16 MXU operands (f32 accumulation): fast path, looser tolerance.
    params_bf = prepare_mha_params(wq, bq, wk, bk, wv, bv, wp, bp, gamma, beta,
                                   n_head=H, mxu_dtype=jnp.bfloat16)
    out_bf, attn_bf = multi_head_attention(memory, decoder_output, params_bf)
    out_bf = jax.block_until_ready(out_bf)
    assert jnp.allclose(attn_bf.astype(jnp.float32), ref_attn, atol=5e-2, rtol=5e-2), \
        "attention mismatch (bf16)"
    assert jnp.allclose(out_bf, ref_out, atol=1.5e-1, rtol=1.5e-1), "output mismatch (bf16)"

    # No-attention fast path (skips the attention-prob HBM writeback entirely).
    out_na = multi_head_attention(memory, decoder_output, params_bf, return_attention=False)
    out_na = jax.block_until_ready(out_na)
    assert jnp.allclose(out_na, out_bf, atol=1e-5, rtol=1e-5), "no-attention path mismatch"

    print("KERNEL_OK")
</pallas_src>

<mosaic_0001>
module attributes {stable_mosaic.version = 11 : i64} {
  func.func @_attention_kernel(%arg0: i32, %arg1: i32, %arg2: memref<1x8x32xf32, #tpu.memory_space<vmem>>, %arg3: memref<1x8x32xf32, #tpu.memory_space<vmem>>, %arg4: memref<32x96xf32, #tpu.memory_space<vmem>>, %arg5: memref<1x96xf32, #tpu.memory_space<vmem>>, %arg6: memref<32x192xf32, #tpu.memory_space<vmem>>, %arg7: memref<1x192xf32, #tpu.memory_space<vmem>>, %arg8: memref<1x3x32x8xf32, #tpu.memory_space<vmem>>, %arg9: memref<1x3x8x8xf32, #tpu.memory_space<vmem>>) attributes {dimension_semantics = [#tpu.dimension_semantics<parallel>, #tpu.dimension_semantics<parallel>], iteration_bounds = array<i64: 2, 1>, scalar_prefetch = 0 : i64, scratch_operands = 0 : i64, tpu.core_type = #tpu.core_type<tc>, window_params = [{transform_indices = @transform_0, window_bounds = array<i64: 1, 8, 32>}, {transform_indices = @transform_1, window_bounds = array<i64: 1, 8, 32>}, {pipeline_mode = #tpu.pipeline_mode<synchronous>, transform_indices = @transform_2, window_bounds = array<i64: 32, 96>}, {pipeline_mode = #tpu.pipeline_mode<synchronous>, transform_indices = @transform_3, window_bounds = array<i64: 1, 96>}, {pipeline_mode = #tpu.pipeline_mode<synchronous>, transform_indices = @transform_4, window_bounds = array<i64: 32, 192>}, {pipeline_mode = #tpu.pipeline_mode<synchronous>, transform_indices = @transform_5, window_bounds = array<i64: 1, 192>}, {transform_indices = @transform_6, window_bounds = array<i64: 1, 3, 32, 8>}, {transform_indices = @transform_7, window_bounds = array<i64: 1, 3, 8, 8>}]} {
    %c0 = arith.constant 0 : index
    %c0_0 = arith.constant 0 : index
    %c0_1 = arith.constant 0 : index
    %0 = vector.load %arg2[%c0, %c0_0, %c0_1] : memref<1x8x32xf32, #tpu.memory_space<vmem>>, vector<1x8x32xf32>
    %1 = vector.shape_cast %0 : vector<1x8x32xf32> to vector<8x32xf32>
    %c0_2 = arith.constant 0 : index
    %c0_3 = arith.constant 0 : index
    %c0_4 = arith.constant 0 : index
    %2 = vector.load %arg3[%c0_2, %c0_3, %c0_4] : memref<1x8x32xf32, #tpu.memory_space<vmem>>, vector<1x8x32xf32>
    %3 = vector.shape_cast %2 : vector<1x8x32xf32> to vector<8x32xf32>
    %c0_5 = arith.constant 0 : index
    %c0_6 = arith.constant 0 : index
    %4 = vector.load %arg4[%c0_5, %c0_6] : memref<32x96xf32, #tpu.memory_space<vmem>>, vector<32x96xf32>
    %cst = arith.constant dense<0.000000e+00> : vector<8x96xf32>
    %5 = tpu.matmul %1, %4, %cst {dimension_numbers = #tpu.dot_dimension_numbers<[1], [0], [0], [1], [0, 0, 1, 1], [], []>} : vector<8x32xf32>, vector<32x96xf32>, vector<8x96xf32> -> vector<8x96xf32>
    %c0_7 = arith.constant 0 : index
    %c0_8 = arith.constant 0 : index
    %6 = vector.load %arg5[%c0_7, %c0_8] : memref<1x96xf32, #tpu.memory_space<vmem>>, vector<1x96xf32>
    %7 = vector.broadcast %6 : vector<1x96xf32> to vector<8x96xf32>
    %8 = arith.addf %5, %7 : vector<8x96xf32>
    %cst_9 = arith.constant 0.176776692 : f32
    %9 = vector.broadcast %cst_9 : f32 to vector<8x96xf32>
    %10 = arith.mulf %8, %9 : vector<8x96xf32>
    %c0_10 = arith.constant 0 : index
    %c0_11 = arith.constant 0 : index
    %11 = vector.load %arg6[%c0_10, %c0_11] : memref<32x192xf32, #tpu.memory_space<vmem>>, vector<32x192xf32>
    %cst_12 = arith.constant dense<0.000000e+00> : vector<8x192xf32>
    %12 = tpu.matmul %3, %11, %cst_12 {dimension_numbers = #tpu.dot_dimension_numbers<[1], [0], [0], [1], [0, 0, 1, 1], [], []>} : vector<8x32xf32>, vector<32x192xf32>, vector<8x192xf32> -> vector<8x192xf32>
    %c0_13 = arith.constant 0 : index
    %c0_14 = arith.constant 0 : index
    %13 = vector.load %arg7[%c0_13, %c0_14] : memref<1x192xf32, #tpu.memory_space<vmem>>, vector<1x192xf32>
    %14 = vector.broadcast %13 : vector<1x192xf32> to vector<8x192xf32>
    %15 = arith.addf %12, %14 : vector<8x192xf32>
    %16 = vector.extract_strided_slice %10 {offsets = [0, 0], sizes = [8, 32], strides = [1, 1]} : vector<8x96xf32> to vector<8x32xf32>
    %17 = vector.extract_strided_slice %15 {offsets = [0, 0], sizes = [8, 32], strides = [1, 1]} : vector<8x192xf32> to vector<8x32xf32>
    %18 = vector.extract_strided_slice %15 {offsets = [0, 96], sizes = [8, 32], strides = [1, 1]} : vector<8x192xf32> to vector<8x32xf32>
    %cst_15 = arith.constant dense<0.000000e+00> : vector<8x8xf32>
    %19 = tpu.matmul %16, %17, %cst_15 {dimension_numbers = #tpu.dot_dimension_numbers<[1], [1], [0], [0], [0, 0, 1, 0], [], []>} : vector<8x32xf32>, vector<8x32xf32>, vector<8x8xf32> -> vector<8x8xf32>
    %cst_16 = arith.constant dense<0xFF800000> : vector<8xf32>
    %20 = vector.multi_reduction <maximumf>, %19, %cst_16 [1] : vector<8x8xf32> to vector<8xf32>
    %21 = vector.shape_cast %20 : vector<8xf32> to vector<8x1xf32>
    %22 = vector.broadcast %21 : vector<8x1xf32> to vector<8x8xf32>
    %23 = arith.subf %19, %22 : vector<8x8xf32>
    %24 = math.exp %23 : vector<8x8xf32>
    %cst_17 = arith.constant dense<0.000000e+00> : vector<8xf32>
    %25 = vector.multi_reduction <add>, %24, %cst_17 [1] : vector<8x8xf32> to vector<8xf32>
    %26 = vector.shape_cast %25 : vector<8xf32> to vector<8x1xf32>
    %27 = tpu.reciprocal %26 {approx = true} : vector<8x1xf32> -> vector<8x1xf32>
    %28 = vector.broadcast %27 : vector<8x1xf32> to vector<8x8xf32>
    %29 = arith.mulf %24, %28 : vector<8x8xf32>
    %c0_18 = arith.constant 0 : index
    %c0_19 = arith.constant 0 : index
    %c0_20 = arith.constant 0 : index
    %c0_21 = arith.constant 0 : index
    %30 = vector.load %arg9[%c0_18, %c0_19, %c0_20, %c0_21] : memref<1x3x8x8xf32, #tpu.memory_space<vmem>>, vector<1x1x8x8xf32>
    %31 = vector.shape_cast %30 : vector<1x1x8x8xf32> to vector<8x8xf32>
    %32 = vector.shape_cast %29 : vector<8x8xf32> to vector<1x1x8x8xf32>
    tpu.vector_store %arg9[%c0_18, %c0_19, %c0_20, %c0_21], %32 {strides = array<i32>} : memref<1x3x8x8xf32, #tpu.memory_space<vmem>>, vector<1x1x8x8xf32>,
    %cst_22 = arith.constant dense<0.000000e+00> : vector<32x8xf32>
    %33 = tpu.matmul %18, %29, %cst_22 {dimension_numbers = #tpu.dot_dimension_numbers<[0], [1], [1], [0], [0, 1, 1, 0], [], []>} : vector<8x32xf32>, vector<8x8xf32>, vector<32x8xf32> -> vector<32x8xf32>
    %c0_23 = arith.constant 0 : index
    %c0_24 = arith.constant 0 : index
    %c0_25 = arith.constant 0 : index
    %c0_26 = arith.constant 0 : index
    %34 = vector.load %arg8[%c0_23, %c0_24, %c0_25, %c0_26] : memref<1x3x32x8xf32, #tpu.memory_space<vmem>>, vector<1x1x32x8xf32>
    %35 = vector.shape_cast %34 : vector<1x1x32x8xf32> to vector<32x8xf32>
    %36 = vector.shape_cast %33 : vector<32x8xf32> to vector<1x1x32x8xf32>
    tpu.vector_store %arg8[%c0_23, %c0_24, %c0_25, %c0_26], %36 {strides = array<i32>} : memref<1x3x32x8xf32, #tpu.memory_space<vmem>>, vector<1x1x32x8xf32>,
    %37 = vector.extract_strided_slice %10 {offsets = [0, 32], sizes = [8, 32], strides = [1, 1]} : vector<8x96xf32> to vector<8x32xf32>
    %38 = vector.extract_strided_slice %15 {offsets = [0, 32], sizes = [8, 32], strides = [1, 1]} : vector<8x192xf32> to vector<8x32xf32>
    %39 = vector.extract_strided_slice %15 {offsets = [0, 128], sizes = [8, 32], strides = [1, 1]} : vector<8x192xf32> to vector<8x32xf32>
    %cst_27 = arith.constant dense<0.000000e+00> : vector<8x8xf32>
    %40 = tpu.matmul %37, %38, %cst_27 {dimension_numbers = #tpu.dot_dimension_numbers<[1], [1], [0], [0], [0, 0, 1, 0], [], []>} : vector<8x32xf32>, vector<8x32xf32>, vector<8x8xf32> -> vector<8x8xf32>
    %cst_28 = arith.constant dense<0xFF800000> : vector<8xf32>
    %41 = vector.multi_reduction <maximumf>, %40, %cst_28 [1] : vector<8x8xf32> to vector<8xf32>
    %42 = vector.shape_cast %41 : vector<8xf32> to vector<8x1xf32>
    %43 = vector.broadcast %42 : vector<8x1xf32> to vector<8x8xf32>
    %44 = arith.subf %40, %43 : vector<8x8xf32>
    %45 = math.exp %44 : vector<8x8xf32>
    %cst_29 = arith.constant dense<0.000000e+00> : vector<8xf32>
    %46 = vector.multi_reduction <add>, %45, %cst_29 [1] : vector<8x8xf32> to vector<8xf32>
    %47 = vector.shape_cast %46 : vector<8xf32> to vector<8x1xf32>
    %48 = tpu.reciprocal %47 {approx = true} : vector<8x1xf32> -> vector<8x1xf32>
    %49 = vector.broadcast %48 : vector<8x1xf32> to vector<8x8xf32>
    %50 = arith.mulf %45, %49 : vector<8x8xf32>
    %c0_30 = arith.constant 0 : index
    %c1 = arith.constant 1 : index
    %c0_31 = arith.constant 0 : index
    %c0_32 = arith.constant 0 : index
    %51 = vector.load %arg9[%c0_30, %c1, %c0_31, %c0_32] : memref<1x3x8x8xf32, #tpu.memory_space<vmem>>, vector<1x1x8x8xf32>
    %52 = vector.shape_cast %51 : vector<1x1x8x8xf32> to vector<8x8xf32>
    %53 = vector.shape_cast %50 : vector<8x8xf32> to vector<1x1x8x8xf32>
    tpu.vector_store %arg9[%c0_30, %c1, %c0_31, %c0_32], %53 {strides = array<i32>} : memref<1x3x8x8xf32, #tpu.memory_space<vmem>>, vector<1x1x8x8xf32>,
    %cst_33 = arith.constant dense<0.000000e+00> : vector<32x8xf32>
    %54 = tpu.matmul %39, %50, %cst_33 {dimension_numbers = #tpu.dot_dimension_numbers<[0], [1], [1], [0], [0, 1, 1, 0], [], []>} : vector<8x32xf32>, vector<8x8xf32>, vector<32x8xf32> -> vector<32x8xf32>
    %c0_34 = arith.constant 0 : index
    %c1_35 = arith.constant 1 : index
    %c0_36 = arith.constant 0 : index
    %c0_37 = arith.constant 0 : index
    %55 = vector.load %arg8[%c0_34, %c1_35, %c0_36, %c0_37] : memref<1x3x32x8xf32, #tpu.memory_space<vmem>>, vector<1x1x32x8xf32>
    %56 = vector.shape_cast %55 : vector<1x1x32x8xf32> to vector<32x8xf32>
    %57 = vector.shape_cast %54 : vector<32x8xf32> to vector<1x1x32x8xf32>
    tpu.vector_store %arg8[%c0_34, %c1_35, %c0_36, %c0_37], %57 {strides = array<i32>} : memref<1x3x32x8xf32, #tpu.memory_space<vmem>>, vector<1x1x32x8xf32>,
    %58 = vector.extract_strided_slice %10 {offsets = [0, 64], sizes = [8, 32], strides = [1, 1]} : vector<8x96xf32> to vector<8x32xf32>
    %59 = vector.extract_strided_slice %15 {offsets = [0, 64], sizes = [8, 32], strides = [1, 1]} : vector<8x192xf32> to vector<8x32xf32>
    %60 = vector.extract_strided_slice %15 {offsets = [0, 160], sizes = [8, 32], strides = [1, 1]} : vector<8x192xf32> to vector<8x32xf32>
    %cst_38 = arith.constant dense<0.000000e+00> : vector<8x8xf32>
    %61 = tpu.matmul %58, %59, %cst_38 {dimension_numbers = #tpu.dot_dimension_numbers<[1], [1], [0], [0], [0, 0, 1, 0], [], []>} : vector<8x32xf32>, vector<8x32xf32>, vector<8x8xf32> -> vector<8x8xf32>
    %cst_39 = arith.constant dense<0xFF800000> : vector<8xf32>
    %62 = vector.multi_reduction <maximumf>, %61, %cst_39 [1] : vector<8x8xf32> to vector<8xf32>
    %63 = vector.shape_cast %62 : vector<8xf32> to vector<8x1xf32>
    %64 = vector.broadcast %63 : vector<8x1xf32> to vector<8x8xf32>
    %65 = arith.subf %61, %64 : vector<8x8xf32>
    %66 = math.exp %65 : vector<8x8xf32>
    %cst_40 = arith.constant dense<0.000000e+00> : vector<8xf32>
    %67 = vector.multi_reduction <add>, %66, %cst_40 [1] : vector<8x8xf32> to vector<8xf32>
    %68 = vector.shape_cast %67 : vector<8xf32> to vector<8x1xf32>
    %69 = tpu.reciprocal %68 {approx = true} : vector<8x1xf32> -> vector<8x1xf32>
    %70 = vector.broadcast %69 : vector<8x1xf32> to vector<8x8xf32>
    %71 = arith.mulf %66, %70 : vector<8x8xf32>
    %c0_41 = arith.constant 0 : index
    %c2 = arith.constant 2 : index
    %c0_42 = arith.constant 0 : index
    %c0_43 = arith.constant 0 : index
    %72 = vector.load %arg9[%c0_41, %c2, %c0_42, %c0_43] : memref<1x3x8x8xf32, #tpu.memory_space<vmem>>, vector<1x1x8x8xf32>
    %73 = vector.shape_cast %72 : vector<1x1x8x8xf32> to vector<8x8xf32>
    %74 = vector.shape_cast %71 : vector<8x8xf32> to vector<1x1x8x8xf32>
    tpu.vector_store %arg9[%c0_41, %c2, %c0_42, %c0_43], %74 {strides = array<i32>} : memref<1x3x8x8xf32, #tpu.memory_space<vmem>>, vector<1x1x8x8xf32>,
    %cst_44 = arith.constant dense<0.000000e+00> : vector<32x8xf32>
    %75 = tpu.matmul %60, %71, %cst_44 {dimension_numbers = #tpu.dot_dimension_numbers<[0], [1], [1], [0], [0, 1, 1, 0], [], []>} : vector<8x32xf32>, vector<8x8xf32>, vector<32x8xf32> -> vector<32x8xf32>
    %c0_45 = arith.constant 0 : index
    %c2_46 = arith.constant 2 : index
    %c0_47 = arith.constant 0 : index
    %c0_48 = arith.constant 0 : index
    %76 = vector.load %arg8[%c0_45, %c2_46, %c0_47, %c0_48] : memref<1x3x32x8xf32, #tpu.memory_space<vmem>>, vector<1x1x32x8xf32>
    %77 = vector.shape_cast %76 : vector<1x1x32x8xf32> to vector<32x8xf32>
    %78 = vector.shape_cast %75 : vector<32x8xf32> to vector<1x1x32x8xf32>
    tpu.vector_store %arg8[%c0_45, %c2_46, %c0_47, %c0_48], %78 {strides = array<i32>} : memref<1x3x32x8xf32, #tpu.memory_space<vmem>>, vector<1x1x32x8xf32>,
    return
  }
  func.func @transform_0(%arg0: i32, %arg1: i32) -> (i32, i32, i32) {
    %c0_i32 = arith.constant 0 : i32
    %c0_i32_0 = arith.constant 0 : i32
    return %arg0, %arg1, %c0_i32 : i32, i32, i32
  }
  func.func @transform_1(%arg0: i32, %arg1: i32) -> (i32, i32, i32) {
    %c0_i32 = arith.constant 0 : i32
    %c0_i32_0 = arith.constant 0 : i32
    %c0_i32_1 = arith.constant 0 : i32
    return %arg0, %c0_i32, %c0_i32_0 : i32, i32, i32
  }
  func.func @transform_2(%arg0: i32, %arg1: i32) -> (i32, i32) {
    %c0_i32 = arith.constant 0 : i32
    %c0_i32_0 = arith.constant 0 : i32
    %c0_i32_1 = arith.constant 0 : i32
    return %c0_i32, %c0_i32_0 : i32, i32
  }
  func.func @transform_3(%arg0: i32, %arg1: i32) -> (i32, i32) {
    %c0_i32 = arith.constant 0 : i32
    %c0_i32_0 = arith.constant 0 : i32
    %c0_i32_1 = arith.constant 0 : i32
    return %c0_i32, %c0_i32_0 : i32, i32
  }
  func.func @transform_4(%arg0: i32, %arg1: i32) -> (i32, i32) {
    %c0_i32 = arith.constant 0 : i32
    %c0_i32_0 = arith.constant 0 : i32
    %c0_i32_1 = arith.constant 0 : i32
    return %c0_i32, %c0_i32_0 : i32, i32
  }
  func.func @transform_5(%arg0: i32, %arg1: i32) -> (i32, i32) {
    %c0_i32 = arith.constant 0 : i32
    %c0_i32_0 = arith.constant 0 : i32
    %c0_i32_1 = arith.constant 0 : i32
    return %c0_i32, %c0_i32_0 : i32, i32
  }
  func.func @transform_6(%arg0: i32, %arg1: i32) -> (i32, i32, i32, i32) {
    %c0_i32 = arith.constant 0 : i32
    %c0_i32_0 = arith.constant 0 : i32
    %c0_i32_1 = arith.constant 0 : i32
    return %arg0, %c0_i32, %c0_i32_0, %arg1 : i32, i32, i32, i32
  }
  func.func @transform_7(%arg0: i32, %arg1: i32) -> (i32, i32, i32, i32) {
    %c0_i32 = arith.constant 0 : i32
    %c0_i32_0 = arith.constant 0 : i32
    %c0_i32_1 = arith.constant 0 : i32
    return %arg0, %c0_i32, %arg1, %c0_i32_0 : i32, i32, i32, i32
  }
}

</mosaic_0001>

<llo_original>
// kernel: tpu_custom_call.1
$region0: #{tpu_custom_call.1}
  #allocation0 [shape = 'u32[]', space=smem, size = 0x4, offset = 0x4, fixed_abs, tag = 'smem constant byte address 0x4 - core index']
  #allocation1 [shape = 'u32[144,128]{1,0:T(1,128)}', space=vmem, size = 0x12000, scoped, tag = 'internal scratch']
  %s0 = inlined_call_operand.hbm [shape: f32[2,8,32], index: 0, kind: input, shape index: {}]
  %s1 = inlined_call_operand.hbm [shape: f32[2,8,32], index: 1, kind: input, shape index: {}]
  %s2 = inlined_call_operand.hbm [shape: f32[32,96], index: 2, kind: input, shape index: {}]
  %s3 = inlined_call_operand.vmem [shape: f32[1,96], index: 3, kind: input, shape index: {}]
  %s4 = inlined_call_operand.hbm [shape: f32[32,192], index: 4, kind: input, shape index: {}]
  %s5 = inlined_call_operand.vmem [shape: f32[1,192], index: 5, kind: input, shape index: {}]
  %s6 = inlined_call_operand.vmem [shape: f32[2,3,32,8], index: 6, kind: output, shape index: {0}]
  %s7 = inlined_call_operand.hbm [shape: f32[2,3,8,8], index: 7, kind: output, shape index: {1}]
  %8 = xla_tuple %s6, %s7
  %s9 = sld [smem:[#allocation0]]
  $region81: #{tpu_custom_call.1} parent=0
    _
  %s11 = ssub.s32 1, %s9
  %s12 = scalar_select 0, %s11, %s9
  $region1: #{tpu_custom_call.1} parent=0
    #allocation2 [shape = 'u8[8192]{0}', space=vmem, size = 0x2000, scoped, tag = 'input window, operand 0']
    #allocation3 [shape = 's32[2]{0}', space=sflag, size = 0x8, scoped, tag = 'scoped memory for tpu_custom_call.1']
    #allocation4 [shape = 's32[2]{0}', space=sflag, size = 0x8, scoped, tag = 'scoped memory for tpu_custom_call.1']
    #allocation5 [shape = 'u8[8192]{0}', space=vmem, size = 0x2000, scoped, tag = 'input window, operand 1']
    #allocation6 [shape = 's32[2]{0}', space=sflag, size = 0x8, scoped, tag = 'scoped memory for tpu_custom_call.1']
    #allocation7 [shape = 'u8[16384]{0}', space=vmem, size = 0x4000, scoped, tag = 'input window, operand 2, single buffered']
    #allocation8 [shape = 'u8[32768]{0}', space=vmem, size = 0x8000, scoped, tag = 'input window, operand 4, single buffered']
    #allocation9 [shape = 's32[1]{0}', space=sflag, size = 0x4, scoped, tag = 'scoped memory for tpu_custom_call.1']
    #allocation10 [shape = 'u8[24576]{0}', space=vmem, size = 0x6000, scoped, tag = 'output window, operand 1']
    %13 = vsyncpa [#allocation3], 0
    %s14 = scalar_lea.sflag [#allocation3], 1
    %15 = vsyncpa %s14, 0
    %16 = vsyncpa [#allocation6], 0
    %s17 = scalar_lea.sflag [#allocation6], 1
    %18 = vsyncpa %s17, 0
    %19 = vsyncpa [#allocation9], 0
    %20 = vsyncpa [#allocation4], 0
    %s21 = scalar_lea.sflag [#allocation4], 1
    %22 = vsyncpa %s21, 0
    loop: start=0, step=1, limit=4
    $region2: #{tpu_custom_call.1} parent=1 // loop_pre_header
      _
    $region3: #{tpu_custom_call.1} parent=1 // loop_header
      %s24 = sphi 0, %s28
      %p25 = scmp.ge.s32.totalorder %s24, 4
      %s31 = sphi 0, %s43
      %s32 = sphi 0, %s39
      %s33 = sphi 0, %s31
      %s34 = sphi 0, %s32
      %s35 = sphi 0, %s33
      %s36 = sphi 0, %s34
      %s48 = sphi 0, %s50
      %s51 = sphi 0, %s48
      %s52 = sphi 0, %s51
      %s68 = sphi 0, %s52
      %s74 = sphi 0, %s76
      %s77 = sphi 0, %s74
      %s78 = sphi 0, %s77
      %s94 = sphi 0, %s78
      %s98 = sphi 0, %s98
      %s100 = sphi 0, %s98
      %s101 = sphi 0, %s100
      %s115 = sphi 0, %s101
      %s119 = sphi 0, %s119
      %s121 = sphi 0, %s119
      %s122 = sphi 0, %s121
      %s136 = sphi 0, %s122
      %s140 = sphi 0, %s140
      %s142 = sphi 0, %s140
      %s143 = sphi 0, %s142
      %s157 = sphi 0, %s143
      %s161 = sphi 0, %s161
      %s163 = sphi 0, %s161
      %s164 = sphi 0, %s163
      %s178 = sphi 0, %s164
      %s186 = sphi 0, %s188
      %s189 = sphi 0, %s186
      %s190 = sphi 0, %s189
      %s206 = sphi 0, %s190
      %s214 = sphi 0, %s216
      %s217 = sphi 0, %s214
      %s218 = sphi 0, %s217
      %s234 = sphi 0, %s218
    $region4: #{tpu_custom_call.1} parent=1 // loop_header_branch
      %27 = sbr.rel (%p25) target = $region8
    $region5: #{tpu_custom_call.1} parent=1 // loop_body
      %s29 = ssub.s32 %s24, 1
      %s30 = ssub.s32 %s24, 2
      %s37 = sadd.s32 1, %s32
      %p38 = scmp.ge.s32.totalorder %s37, 1
      %s39 = scalar_select %p38, 0, %s37
      %s40 = sadd.s32 1, %s31
      %s41 = scalar_select %p38, %s40, %s31
      %p42 = scmp.ge.s32.totalorder %s41, 2
      %s43 = scalar_select %p42, 0, %s41
      %s44 = ssub.s32 %s31, %s43
      %s45 = ssub.s32 %s32, %s39
      %s46 = sor.u32 %s44, %s45
      %p47 = scmp.eq.s32.totalorder %s46, 0
      %s49 = sadd.s32 %s48, 1
      %s50 = scalar_select %p47, %s48, %s49
      %p53 = pneg %p47
      %p54 = scmp.eq.s32.totalorder %s24, 1
      %p55 = por %p53, %p54
      %p56 = scmp.ne.s32.totalorder %s48, %s51
      %p57 = scmp.eq.s32.totalorder %s24, 0
      %p58 = por %p56, %p57
      %p59 = scmp.ne.s32.totalorder %s48, %s51
      %p60 = scmp.eq.s32.totalorder %s29, 1
      %p61 = por %p59, %p60
      %p62 = scmp.ne.s32.totalorder %s51, %s52
      %p63 = scmp.eq.s32.totalorder %s29, 0
      %p64 = por %p62, %p63
      %p65 = scmp.ne.s32.totalorder %s51, %s52
      %p66 = scmp.eq.s32.totalorder %s30, 1
      %p67 = por %p65, %p66
      %p69 = scmp.ne.s32.totalorder %s52, %s68
      %p70 = scmp.eq.s32.totalorder %s30, 0
      %p71 = por %p69, %p70
      %s72 = ssub.s32 %s31, %s43
      %p73 = scmp.eq.s32.totalorder %s72, 0
      %s75 = sadd.s32 %s74, 1
      %s76 = scalar_select %p73, %s74, %s75
      %p79 = pneg %p73
      %p80 = scmp.eq.s32.totalorder %s24, 1
      %p81 = por %p79, %p80
      %p82 = scmp.ne.s32.totalorder %s74, %s77
      %p83 = scmp.eq.s32.totalorder %s24, 0
      %p84 = por %p82, %p83
      %p85 = scmp.ne.s32.totalorder %s74, %s77
      %p86 = scmp.eq.s32.totalorder %s29, 1
      %p87 = por %p85, %p86
      %p88 = scmp.ne.s32.totalorder %s77, %s78
      %p89 = scmp.eq.s32.totalorder %s29, 0
      %p90 = por %p88, %p89
      %p91 = scmp.ne.s32.totalorder %s77, %s78
      %p92 = scmp.eq.s32.totalorder %s30, 1
      %p93 = por %p91, %p92
      %p95 = scmp.ne.s32.totalorder %s78, %s94
      %p96 = scmp.eq.s32.totalorder %s30, 0
      %p97 = por %p95, %p96
      %s99 = sadd.s32 %s98, 1
      %p102 = scmp.eq.s32.totalorder %s24, 1
      %p103 = scmp.ne.s32.totalorder %s98, %s100
      %p104 = scmp.eq.s32.totalorder %s24, 0
      %p105 = por %p103, %p104
      %p106 = scmp.ne.s32.totalorder %s98, %s100
      %p107 = scmp.eq.s32.totalorder %s29, 1
      %p108 = por %p106, %p107
      %p109 = scmp.ne.s32.totalorder %s100, %s101
      %p110 = scmp.eq.s32.totalorder %s29, 0
      %p111 = por %p109, %p110
      %p112 = scmp.ne.s32.totalorder %s100, %s101
      %p113 = scmp.eq.s32.totalorder %s30, 1
      %p114 = por %p112, %p113
      %p116 = scmp.ne.s32.totalorder %s101, %s115
      %p117 = scmp.eq.s32.totalorder %s30, 0
      %p118 = por %p116, %p117
      %s120 = sadd.s32 %s119, 1
      %p123 = scmp.eq.s32.totalorder %s24, 1
      %p124 = scmp.ne.s32.totalorder %s119, %s121
      %p125 = scmp.eq.s32.totalorder %s24, 0
      %p126 = por %p124, %p125
      %p127 = scmp.ne.s32.totalorder %s119, %s121
      %p128 = scmp.eq.s32.totalorder %s29, 1
      %p129 = por %p127, %p128
      %p130 = scmp.ne.s32.totalorder %s121, %s122
      %p131 = scmp.eq.s32.totalorder %s29, 0
      %p132 = por %p130, %p131
      %p133 = scmp.ne.s32.totalorder %s121, %s122
      %p134 = scmp.eq.s32.totalorder %s30, 1
      %p135 = por %p133, %p134
      %p137 = scmp.ne.s32.totalorder %s122, %s136
      %p138 = scmp.eq.s32.totalorder %s30, 0
      %p139 = por %p137, %p138
      %s141 = sadd.s32 %s140, 1
      %p144 = scmp.eq.s32.totalorder %s24, 1
      %p145 = scmp.ne.s32.totalorder %s140, %s142
      %p146 = scmp.eq.s32.totalorder %s24, 0
      %p147 = por %p145, %p146
      %p148 = scmp.ne.s32.totalorder %s140, %s142
      %p149 = scmp.eq.s32.totalorder %s29, 1
      %p150 = por %p148, %p149
      %p151 = scmp.ne.s32.totalorder %s142, %s143
      %p152 = scmp.eq.s32.totalorder %s29, 0
      %p153 = por %p151, %p152
      %p154 = scmp.ne.s32.totalorder %s142, %s143
      %p155 = scmp.eq.s32.totalorder %s30, 1
      %p156 = por %p154, %p155
      %p158 = scmp.ne.s32.totalorder %s143, %s157
      %p159 = scmp.eq.s32.totalorder %s30, 0
      %p160 = por %p158, %p159
      %s162 = sadd.s32 %s161, 1
      %p165 = scmp.eq.s32.totalorder %s24, 1
      %p166 = scmp.ne.s32.totalorder %s161, %s163
      %p167 = scmp.eq.s32.totalorder %s24, 0
      %p168 = por %p166, %p167
      %p169 = scmp.ne.s32.totalorder %s161, %s163
      %p170 = scmp.eq.s32.totalorder %s29, 1
      %p171 = por %p169, %p170
      %p172 = scmp.ne.s32.totalorder %s163, %s164
      %p173 = scmp.eq.s32.totalorder %s29, 0
      %p174 = por %p172, %p173
      %p175 = scmp.ne.s32.totalorder %s163, %s164
      %p176 = scmp.eq.s32.totalorder %s30, 1
      %p177 = por %p175, %p176
      %p179 = scmp.ne.s32.totalorder %s164, %s178
      %p180 = scmp.eq.s32.totalorder %s30, 0
      %p181 = por %p179, %p180
      %s182 = ssub.s32 %s31, %s43
      %s183 = ssub.s32 %s32, %s39
      %s184 = sor.u32 %s182, %s183
      %p185 = scmp.eq.s32.totalorder %s184, 0
      %s187 = sadd.s32 %s186, 1
      %s188 = scalar_select %p185, %s186, %s187
      %p191 = pneg %p185
      %p192 = scmp.eq.s32.totalorder %s24, 1
      %p193 = por %p191, %p192
      %p194 = scmp.ne.s32.totalorder %s186, %s189
      %p195 = scmp.eq.s32.totalorder %s24, 0
      %p196 = por %p194, %p195
      %p197 = scmp.ne.s32.totalorder %s186, %s189
      %p198 = scmp.eq.s32.totalorder %s29, 1
      %p199 = por %p197, %p198
      %p200 = scmp.ne.s32.totalorder %s189, %s190
      %p201 = scmp.eq.s32.totalorder %s29, 0
      %p202 = por %p200, %p201
      %p203 = scmp.ne.s32.totalorder %s189, %s190
      %p204 = scmp.eq.s32.totalorder %s30, 1
      %p205 = por %p203, %p204
      %p207 = scmp.ne.s32.totalorder %s190, %s206
      %p208 = scmp.eq.s32.totalorder %s30, 0
      %p209 = por %p207, %p208
      %s210 = ssub.s32 %s31, %s43
      %s211 = ssub.s32 %s32, %s39
      %s212 = sor.u32 %s210, %s211
      %p213 = scmp.eq.s32.totalorder %s212, 0
      %s215 = sadd.s32 %s214, 1
      %s216 = scalar_select %p213, %s214, %s215
      %p219 = pneg %p213
      %p220 = scmp.eq.s32.totalorder %s24, 1
      %p221 = por %p219, %p220
      %p222 = scmp.ne.s32.totalorder %s214, %s217
      %p223 = scmp.eq.s32.totalorder %s24, 0
      %p224 = por %p222, %p223
      %p225 = scmp.ne.s32.totalorder %s214, %s217
      %p226 = scmp.eq.s32.totalorder %s29, 1
      %p227 = por %p225, %p226
      %p228 = scmp.ne.s32.totalorder %s217, %s218
      %p229 = scmp.eq.s32.totalorder %s29, 0
      %p230 = por %p228, %p229
      %p231 = scmp.ne.s32.totalorder %s217, %s218
      %p232 = scmp.eq.s32.totalorder %s30, 1
      %p233 = por %p231, %p232
      %p235 = scmp.ne.s32.totalorder %s218, %s234
      %p236 = scmp.eq.s32.totalorder %s30, 0
      %p237 = por %p235, %p236
      %p238 = scmp.le.s32.totalorder 1, %s24
      %p239 = scmp.lt.s32.totalorder %s24, 3
      %p240 = pnand %p238, %p239
      %p241 = pneg %p240
      // Predicated region
      $region9: #{tpu_custom_call.1} parent=5 // pred_check
        _
      $region10: #{tpu_custom_call.1} parent=5 // pred_check_branch
        %243 = sbr.rel (%p240) target = $region12
      $region11: #{tpu_custom_call.1} parent=5 // pred_region
        %s244 = ssub.s32 %s24, 1
        // Predicated region
        $region13: #{tpu_custom_call.1} parent=11 // pred_check
          %p245 = pneg %p111
        $region14: #{tpu_custom_call.1} parent=11 // pred_check_branch
          %247 = sbr.rel (%p245) target = $region16
        $region15: #{tpu_custom_call.1} parent=11 // pred_region
          %s249 = ssub.s32 512, 512
          %250 = vsyncadd [#allocation6], %s249
          %s251 = sshll.u32 [#allocation7], 4
          %s252 = int_to_ptr.vmem [resolvable:$true] %s251
          %257 = dma.hbm_to_vmem [thread:$0]  %s2, 512, %s252, [#allocation6], 128, 128, 8
        $region16: #{tpu_custom_call.1} parent=11 // pred_fallthru
          _
        // Predicated region
        $region17: #{tpu_custom_call.1} parent=11 // pred_check
          %p258 = pneg %p132
        $region18: #{tpu_custom_call.1} parent=11 // pred_check_branch
          %260 = sbr.rel (%p258) target = $region20
        $region19: #{tpu_custom_call.1} parent=11 // pred_region
          _
        $region20: #{tpu_custom_call.1} parent=11 // pred_fallthru
          _
        // Predicated region
        $region21: #{tpu_custom_call.1} parent=11 // pred_check
          %p261 = pneg %p153
        $region22: #{tpu_custom_call.1} parent=11 // pred_check_branch
          %263 = sbr.rel (%p261) target = $region24
        $region23: #{tpu_custom_call.1} parent=11 // pred_region
          %s265 = ssub.s32 1024, 1024
          %266 = vsyncadd [#allocation9], %s265
          %s267 = sshll.u32 [#allocation8], 4
          %s268 = int_to_ptr.vmem [resolvable:$true] %s267
          %273 = dma.hbm_to_vmem [thread:$0]  %s4, 1024, %s268, [#allocation9], 256, 256, 16
        $region24: #{tpu_custom_call.1} parent=11 // pred_fallthru
          _
        // Predicated region
        $region25: #{tpu_custom_call.1} parent=11 // pred_check
          %p274 = pneg %p174
        $region26: #{tpu_custom_call.1} parent=11 // pred_check_branch
          %276 = sbr.rel (%p274) target = $region28
        $region27: #{tpu_custom_call.1} parent=11 // pred_region
          _
        $region28: #{tpu_custom_call.1} parent=11 // pred_fallthru
          _
      $region12: #{tpu_custom_call.1} parent=5 // pred_fallthru
        _
      %p277 = scmp.lt.s32.totalorder %s24, 2
      // Predicated region
      $region29: #{tpu_custom_call.1} parent=5 // pred_check
        %p278 = pneg %p277
      $region30: #{tpu_custom_call.1} parent=5 // pred_check_branch
        %280 = sbr.rel (%p278) target = $region32
      $region31: #{tpu_custom_call.1} parent=5 // pred_region
        // Predicated region
        $region33: #{tpu_custom_call.1} parent=31 // pred_check
          %p281 = pneg %p58
        $region34: #{tpu_custom_call.1} parent=31 // pred_check_branch
          %283 = sbr.rel (%p281) target = $region36
        $region35: #{tpu_custom_call.1} parent=31 // pred_region
          %s284 = sand.u32 %s48, 1
          %s285 = scalar_lea.sflag [#allocation3], %s284
          %s286 = sand.u32 %s48, 1
          %s287 = smul.addr %s286, 8
          %s288 = scalar_lea.vmem [#allocation2], %s287
          %s290 = ssub.s32 128, 128
          %291 = vsyncadd %s285, %s290
          %s292 = sadd.s32 %s32, %s31
          %s293 = smul.addr %s292, 128
          %s294 = scalar_lea.hbm %s0, %s293
          %s296 = sshll.u32 %s288, 4
          %s297 = int_to_ptr.vmem [resolvable:$true] %s296
          %299 = dma.hbm_to_vmem [thread:$0]  %s294, 128, %s297, %s285
        $region36: #{tpu_custom_call.1} parent=31 // pred_fallthru
          _
        // Predicated region
        $region37: #{tpu_custom_call.1} parent=31 // pred_check
          %p300 = pneg %p84
        $region38: #{tpu_custom_call.1} parent=31 // pred_check_branch
          %302 = sbr.rel (%p300) target = $region40
        $region39: #{tpu_custom_call.1} parent=31 // pred_region
          %s303 = sand.u32 %s24, 1
          %s304 = scalar_lea.sflag [#allocation6], %s303
          %s305 = sand.u32 %s74, 1
          %s306 = smul.addr %s305, 8
          %s307 = scalar_lea.vmem [#allocation5], %s306
          %s309 = ssub.s32 128, 128
          %310 = vsyncadd %s304, %s309
          %s311 = smul.addr %s31, 128
          %s312 = scalar_lea.hbm %s1, %s311
          %s314 = sshll.u32 %s307, 4
          %s315 = int_to_ptr.vmem [resolvable:$true] %s314
          %317 = dma.hbm_to_vmem [thread:$0]  %s312, 128, %s315, %s304
        $region40: #{tpu_custom_call.1} parent=31 // pred_fallthru
          _
      $region32: #{tpu_custom_call.1} parent=5 // pred_fallthru
        _
      %p318 = scmp.le.s32.totalorder 1, %s24
      %p319 = scmp.lt.s32.totalorder %s24, 3
      %p320 = pnand %p318, %p319
      %p321 = pneg %p320
      // Predicated region
      $region41: #{tpu_custom_call.1} parent=5 // pred_check
        _
      $region42: #{tpu_custom_call.1} parent=5 // pred_check_branch
        %323 = sbr.rel (%p320) target = $region44
      $region43: #{tpu_custom_call.1} parent=5 // pred_region
        %s324 = ssub.s32 %s24, 1
        %s325 = sand.u32 %s51, 1
        %s326 = scalar_lea.sflag [#allocation3], %s325
        %s327 = sand.u32 %s51, 1
        %s328 = smul.addr %s327, 8
        %s329 = scalar_lea.vmem [#allocation2], %s328
        // Predicated region
        $region45: #{tpu_custom_call.1} parent=43 // pred_check
          %p330 = pneg %p64
        $region46: #{tpu_custom_call.1} parent=43 // pred_check_branch
          %332 = sbr.rel (%p330) target = $region48
        $region47: #{tpu_custom_call.1} parent=43 // pred_region
          %333 = dma.done %s326, 128
        $region48: #{tpu_custom_call.1} parent=43 // pred_fallthru
          _
        %s334 = sand.u32 %s29, 1
        %s335 = scalar_lea.sflag [#allocation6], %s334
        %s336 = sand.u32 %s77, 1
        %s337 = smul.addr %s336, 8
        %s338 = scalar_lea.vmem [#allocation5], %s337
        // Predicated region
        $region49: #{tpu_custom_call.1} parent=43 // pred_check
          %p339 = pneg %p90
        $region50: #{tpu_custom_call.1} parent=43 // pred_check_branch
          %341 = sbr.rel (%p339) target = $region52
        $region51: #{tpu_custom_call.1} parent=43 // pred_region
          %342 = dma.done %s335, 128
        $region52: #{tpu_custom_call.1} parent=43 // pred_fallthru
          _
        // Predicated region
        $region53: #{tpu_custom_call.1} parent=43 // pred_check
          %p343 = pneg %p111
        $region54: #{tpu_custom_call.1} parent=43 // pred_check_branch
          %345 = sbr.rel (%p343) target = $region56
        $region55: #{tpu_custom_call.1} parent=43 // pred_region
          %346 = dma.done [#allocation6], 512
        $region56: #{tpu_custom_call.1} parent=43 // pred_fallthru
          _
        // Predicated region
        $region57: #{tpu_custom_call.1} parent=43 // pred_check
          %p347 = pneg %p153
        $region58: #{tpu_custom_call.1} parent=43 // pred_check_branch
          %349 = sbr.rel (%p347) target = $region60
        $region59: #{tpu_custom_call.1} parent=43 // pred_region
          %350 = dma.done [#allocation9], 1024
        $region60: #{tpu_custom_call.1} parent=43 // pred_fallthru
          _
        %s351 = sand.u32 %s51, 1
        %s352 = scalar_lea.sflag [#allocation3], %s351
        %s353 = sand.u32 %s51, 1
        %s354 = smul.addr %s353, 8
        %s355 = scalar_lea.vmem [#allocation2], %s354
        %p356 = pneg %p64
        %p357 = pneg %p61
        %s358 = sand.u32 %s29, 1
        %s359 = scalar_lea.sflag [#allocation6], %s358
        %s360 = sand.u32 %s77, 1
        %s361 = smul.addr %s360, 8
        %s362 = scalar_lea.vmem [#allocation5], %s361
        %p363 = pneg %p90
        %p364 = pneg %p87
        %p365 = pneg %p111
        %p366 = pneg %p108
        %p367 = pneg %p132
        %p368 = pneg %p129
        %p369 = pneg %p153
        %p370 = pneg %p150
        %p371 = pneg %p174
        %p372 = pneg %p171
        %p373 = pneg %p202
        %p374 = pneg %p199
        %p375 = scmp.lt.s32.totalorder %s33, 1
        %s376 = scalar_select %p375, %s33, 1
        %p377 = scmp.lt.s32.totalorder %s34, 0
        %s378 = scalar_select %p377, %s34, 0
        %s379 = smul.addr %s376, 12
        %s380 = sadd.s32 %s378, %s379
        %s381 = smul.addr %s380, 8
        %s382 = scalar_lea.vmem %s6, %s381
        %p383 = pneg %p230
        %p384 = pneg %p227
        %s385 = sand.u32 %s217, 1
        %s386 = scalar_lea.sflag [#allocation4], %s385
        %s387 = sand.u32 %s217, 1
        %s388 = smul.addr %s387, 24
        %s389 = scalar_lea.vmem [#allocation10], %s388
        %p390 = scmp.lt.s32.totalorder %s33, 1
        %s391 = scalar_select %p390, %s33, 1
        %p392 = scmp.lt.s32.totalorder %s34, 0
        %s393 = scalar_select %p392, %s34, 0
        %s394 = smul.addr %s391, 12
        %s395 = sadd.s32 %s393, %s394
        %s396 = smul.addr %s395, 8
        %s397 = scalar_lea.vmem %s6, %s396
        %v398 = vld [vmem:[%s329] sm:$0xff]
        %v399 = vld [vmem:[%s338] sm:$0xff]
        %v400 = vld [vmem:[#allocation7] sm:$0xff]
        %v401 = vld [vmem:[#allocation7 + $0x8] sm:$0xff]
        %v402 = vld [vmem:[#allocation7 + $0x10] sm:$0xff]
        %v403 = vld [vmem:[#allocation7 + $0x18] sm:$0xff]
        %v404 = vld [vmem:[%s3] sm:$0x1]
        %v406 = vlaneseq
        %v407 = vshrl.u32 %v406, 7
        %v408 = vsub.s32 0, %v407
        %v409 = vrot.slane %v404, %v408
        %vm411 = vcmask 261120
        %v413 = vsel %vm411, %v398, 0
        %415 = vmatprep.subr.mxu0 0.0
        %416 = vmatpush1.msra.mxu0 %v400
        %417 = vmatprep.subr.mxu0 0.0
        %418 = vmatpush1.msra.mxu0 %v401
        %419 = vmatprep.subr.mxu0 0.0
        %420 = vmatpush1.msra.mxu0 %v402
        %421 = vmatprep.subr.mxu0 0.0
        %422 = vmatpush1.msra.mxu0 %v403
        %423 = vmatprep.subr.mxu0 0.0
        %424 = vmatpush1.msra.mxu0 0.0
        %425 = vmatprep.subr.mxu0 0.0
        %426 = vmatpush1.msra.mxu0 0.0
        %427 = vmatprep.subr.mxu0 0.0
        %428 = vmatpush1.msra.mxu0 0.0
        %429 = vmatprep.subr.mxu0 0.0
        %430 = vmatpush1.msra.mxu0 0.0
        %431 = vmatprep.subr.mxu0 0.0
        %432 = vmatpush1.msra.mxu0 0.0
        %433 = vmatprep.subr.mxu0 0.0
        %434 = vmatpush1.msra.mxu0 0.0
        %435 = vmatprep.subr.mxu0 0.0
        %436 = vmatpush1.msra.mxu0 0.0
        %437 = vmatprep.subr.mxu0 0.0
        %438 = vmatpush1.msra.mxu0 0.0
        %439 = vmatprep.subr.mxu0 0.0
        %440 = vmatpush1.msra.mxu0 0.0
        %441 = vmatprep.subr.mxu0 0.0
        %442 = vmatpush1.msra.mxu0 0.0
        %443 = vmatprep.subr.mxu0 0.0
        %444 = vmatpush1.msra.mxu0 0.0
        %445 = vmatprep.subr.mxu0 0.0
        %446 = vmatpush1.msra.mxu0 0.0
        %447 = vmatprep.subr.mxu0 0.0
        %448 = vmatpush1.msra.mxu0 0.0
        %449 = vmatprep.subr.mxu0 0.0
        %450 = vmatpush1.msra.mxu0 0.0
        %451 = vmatprep.subr.mxu0 0.0
        %452 = vmatpush1.msra.mxu0 0.0
        %453 = vmatprep.subr.mxu0 0.0
        %454 = vmatpush1.msra.mxu0 0.0
        %455 = vmatprep.subr.mxu0 0.0
        %456 = vmatpush1.msra.mxu0 0.0
        %457 = vmatprep.subr.mxu0 0.0
        %458 = vmatpush1.msra.mxu0 0.0
        %459 = vmatprep.subr.mxu0 0.0
        %460 = vmatpush1.msra.mxu0 0.0
        %461 = vmatprep.subr.mxu0 0.0
        %462 = vmatpush1.msra.mxu0 0.0
        %463 = vmatprep.subr.mxu0 0.0
        %464 = vmatpush1.msra.mxu0 0.0
        %465 = vmatprep.subr.mxu0 0.0
        %466 = vmatpush1.msra.mxu0 0.0
        %467 = vmatprep.subr.mxu0 0.0
        %468 = vmatpush1.msra.mxu0 0.0
        %469 = vmatprep.subr.mxu0 0.0
        %470 = vmatpush1.msra.mxu0 0.0
        %471 = vmatprep.subr.mxu0 0.0
        %472 = vmatpush1.msra.mxu0 0.0
        %473 = vmatprep.subr.mxu0 0.0
        %474 = vmatpush1.msra.mxu0 0.0
        %475 = vmatprep.subr.mxu0 0.0
        %476 = vmatpush1.msra.mxu0 0.0
        %477 = vmatprep.subr.mxu0 0.0
        %478 = vmatpush1.msra.mxu0 0.0
        %479 = vmatprep.mubr.f32.mxu0 0.0
        %480 = vmatmul.mubr.f32.gmra.mrb[0].mxu0 %v413
        %v481 = vpop.f32.mrb[0].mxu0
        %v482 = vadd.f32 %v409, %v481
        %v483 = vpop.f32.mrb[0].mxu0
        %484 = vdwg.mxu0
        %v485 = vmul.f32 %v482, 0.17677669
        %v486 = vld [vmem:[#allocation8] sm:$0xff]
        %v487 = vld [vmem:[#allocation8 + $0x8] sm:$0xff]
        %v488 = vld [vmem:[#allocation8 + $0x10] sm:$0xff]
        %v489 = vld [vmem:[#allocation8 + $0x18] sm:$0xff]
        %v490 = vld [vmem:[#allocation8 + $0x20] sm:$0xff]
        %v491 = vld [vmem:[#allocation8 + $0x28] sm:$0xff]
        %v492 = vld [vmem:[#allocation8 + $0x30] sm:$0xff]
        %v493 = vld [vmem:[#allocation8 + $0x38] sm:$0xff]
        %v494 = vld [vmem:[%s5] sm:$0x3]
        %v496 = vlaneseq
        %v497 = vshrl.u32 %v496, 7
        %v498 = vsub.s32 0, %v497
        %v499 = vrot.slane %v494, %v498
        %v500 = vlaneseq
        %v501 = vshrl.u32 %v500, 7
        %v502 = vsub.s32 1, %v501
        %v503 = vrot.slane %v494, %v502
        %v507 = vsel %vm411, %v399, 0
        %509 = vmatprep.subr.mxu0 %v487
        %510 = vmatpush1.msra.mxu0 %v486
        %511 = vmatprep.subr.mxu0 %v489
        %512 = vmatpush1.msra.mxu0 %v488
        %513 = vmatprep.subr.mxu0 %v491
        %514 = vmatpush1.msra.mxu0 %v490
        %515 = vmatprep.subr.mxu0 %v493
        %516 = vmatpush1.msra.mxu0 %v492
        %517 = vmatprep.subr.mxu0 0.0
        %518 = vmatpush1.msra.mxu0 0.0
        %519 = vmatprep.subr.mxu0 0.0
        %520 = vmatpush1.msra.mxu0 0.0
        %521 = vmatprep.subr.mxu0 0.0
        %522 = vmatpush1.msra.mxu0 0.0
        %523 = vmatprep.subr.mxu0 0.0
        %524 = vmatpush1.msra.mxu0 0.0
        %525 = vmatprep.subr.mxu0 0.0
        %526 = vmatpush1.msra.mxu0 0.0
        %527 = vmatprep.subr.mxu0 0.0
        %528 = vmatpush1.msra.mxu0 0.0
        %529 = vmatprep.subr.mxu0 0.0
        %530 = vmatpush1.msra.mxu0 0.0
        %531 = vmatprep.subr.mxu0 0.0
        %532 = vmatpush1.msra.mxu0 0.0
        %533 = vmatprep.subr.mxu0 0.0
        %534 = vmatpush1.msra.mxu0 0.0
        %535 = vmatprep.subr.mxu0 0.0
        %536 = vmatpush1.msra.mxu0 0.0
        %537 = vmatprep.subr.mxu0 0.0
        %538 = vmatpush1.msra.mxu0 0.0
        %539 = vmatprep.subr.mxu0 0.0
        %540 = vmatpush1.msra.mxu0 0.0
        %541 = vmatprep.subr.mxu0 0.0
        %542 = vmatpush1.msra.mxu0 0.0
        %543 = vmatprep.subr.mxu0 0.0
        %544 = vmatpush1.msra.mxu0 0.0
        %545 = vmatprep.subr.mxu0 0.0
        %546 = vmatpush1.msra.mxu0 0.0
        %547 = vmatprep.subr.mxu0 0.0
        %548 = vmatpush1.msra.mxu0 0.0
        %549 = vmatprep.subr.mxu0 0.0
        %550 = vmatpush1.msra.mxu0 0.0
        %551 = vmatprep.subr.mxu0 0.0
        %552 = vmatpush1.msra.mxu0 0.0
        %553 = vmatprep.subr.mxu0 0.0
        %554 = vmatpush1.msra.mxu0 0.0
        %555 = vmatprep.subr.mxu0 0.0
        %556 = vmatpush1.msra.mxu0 0.0
        %557 = vmatprep.subr.mxu0 0.0
        %558 = vmatpush1.msra.mxu0 0.0
        %559 = vmatprep.subr.mxu0 0.0
        %560 = vmatpush1.msra.mxu0 0.0
        %561 = vmatprep.subr.mxu0 0.0
        %562 = vmatpush1.msra.mxu0 0.0
        %563 = vmatprep.subr.mxu0 0.0
        %564 = vmatpush1.msra.mxu0 0.0
        %565 = vmatprep.subr.mxu0 0.0
        %566 = vmatpush1.msra.mxu0 0.0
        %567 = vmatprep.subr.mxu0 0.0
        %568 = vmatpush1.msra.mxu0 0.0
        %569 = vmatprep.subr.mxu0 0.0
        %570 = vmatpush1.msra.mxu0 0.0
        %571 = vmatprep.subr.mxu0 0.0
        %572 = vmatpush1.msra.mxu0 0.0
        %573 = vmatprep.mubr.f32.mxu0 0.0
        %574 = vmatmul.mubr.f32.gmra.mrb[0].mxu0 %v507
        %v575 = vpop.f32.mrb[0].mxu0
        %v576 = vadd.f32 %v499, %v575
        %v577 = vpop.f32.mrb[0].mxu0
        %v578 = vadd.f32 %v503, %v577
        %579 = vdwg.mxu0
        %v581 = vsel %vm411, %v485, 0
        %v584 = vsel %vm411, %v576, 0
        %586 = vmatprep.subr.mxu0 0.0
        %587 = vmatpush1.xpose.msra.mxu0 %v584
        %588 = vmatprep.subr.mxu0 0.0
        %589 = vmatpush1.xpose.msra.mxu0 0.0
        %590 = vmatprep.subr.mxu0 0.0
        %591 = vmatpush1.xpose.msra.mxu0 0.0
        %592 = vmatprep.subr.mxu0 0.0
        %593 = vmatpush1.xpose.msra.mxu0 0.0
        %594 = vmatprep.subr.mxu0 0.0
        %595 = vmatpush1.xpose.msra.mxu0 0.0
        %596 = vmatprep.subr.mxu0 0.0
        %597 = vmatpush1.xpose.msra.mxu0 0.0
        %598 = vmatprep.subr.mxu0 0.0
        %599 = vmatpush1.xpose.msra.mxu0 0.0
        %600 = vmatprep.subr.mxu0 0.0
        %601 = vmatpush1.xpose.msra.mxu0 0.0
        %602 = vmatprep.subr.mxu0 0.0
        %603 = vmatpush1.xpose.msra.mxu0 0.0
        %604 = vmatprep.subr.mxu0 0.0
        %605 = vmatpush1.xpose.msra.mxu0 0.0
        %606 = vmatprep.subr.mxu0 0.0
        %607 = vmatpush1.xpose.msra.mxu0 0.0
        %608 = vmatprep.subr.mxu0 0.0
        %609 = vmatpush1.xpose.msra.mxu0 0.0
        %610 = vmatprep.subr.mxu0 0.0
        %611 = vmatpush1.xpose.msra.mxu0 0.0
        %612 = vmatprep.subr.mxu0 0.0
        %613 = vmatpush1.xpose.msra.mxu0 0.0
        %614 = vmatprep.subr.mxu0 0.0
        %615 = vmatpush1.xpose.msra.mxu0 0.0
        %616 = vmatprep.subr.mxu0 0.0
        %617 = vmatpush1.xpose.msra.mxu0 0.0
        %618 = vmatprep.subr.mxu0 0.0
        %619 = vmatpush1.xpose.msra.mxu0 0.0
        %620 = vmatprep.subr.mxu0 0.0
        %621 = vmatpush1.xpose.msra.mxu0 0.0
        %622 = vmatprep.subr.mxu0 0.0
        %623 = vmatpush1.xpose.msra.mxu0 0.0
        %624 = vmatprep.subr.mxu0 0.0
        %625 = vmatpush1.xpose.msra.mxu0 0.0
        %626 = vmatprep.subr.mxu0 0.0
        %627 = vmatpush1.xpose.msra.mxu0 0.0
        %628 = vmatprep.subr.mxu0 0.0
        %629 = vmatpush1.xpose.msra.mxu0 0.0
        %630 = vmatprep.subr.mxu0 0.0
        %631 = vmatpush1.xpose.msra.mxu0 0.0
        %632 = vmatprep.subr.mxu0 0.0
        %633 = vmatpush1.xpose.msra.mxu0 0.0
        %634 = vmatprep.subr.mxu0 0.0
        %635 = vmatpush1.xpose.msra.mxu0 0.0
        %636 = vmatprep.subr.mxu0 0.0
        %637 = vmatpush1.xpose.msra.mxu0 0.0
        %638 = vmatprep.subr.mxu0 0.0
        %639 = vmatpush1.xpose.msra.mxu0 0.0
        %640 = vmatprep.subr.mxu0 0.0
        %641 = vmatpush1.xpose.msra.mxu0 0.0
        %642 = vmatprep.subr.mxu0 0.0
        %643 = vmatpush1.xpose.msra.mxu0 0.0
        %644 = vmatprep.subr.mxu0 0.0
        %645 = vmatpush1.xpose.msra.mxu0 0.0
        %646 = vmatprep.subr.mxu0 0.0
        %647 = vmatpush1.xpose.msra.mxu0 0.0
        %648 = vmatprep.subr.mxu0 0.0
        %649 = vmatpush1.xpose.msra.mxu0 0.0
        %650 = vmatprep.mubr.f32.mxu0 0.0
        %651 = vmatmul.mubr.f32.gmra.mrb[0].mxu0 %v581
        %v652 = vpop.f32.mrb[0].mxu0
        %v653 = vadd.f32 0.0, %v652
        %v654 = vpop.f32.mrb[0].mxu0
        %655 = vdwg.mxu0
        %vm656 = vcmask 64512
        %v657 = vsel %vm656, %v653, -inf
        %658 = vmax.xlane.f32.xlu0 %v657
        %v659 = vpop.xlane.xlu0 %658
        %v660 = vsub.f32 %v653, %v659
        %v661 = vmul.f32 %v660, 1.442695
        %v662 = vpow.pop %v661
        %v663 = vsel %vm656, %v662, 0.0
        %664 = vadd.xlane.f32.xlu0 %v663
        %v665 = vpop.xlane.xlu0 %664
        %v666 = vrcp.pop %v665
        %v667 = vmul.f32 %v662, %v666
        %668 = vst.msk [vmem:[%s389] sm:$0xff] %vm656, %v667
        %669 = vrot.lane.b32.xlu0 %v576, 32
        %v670 = vpop.permute.xlu0 %669
        %672 = vxpose.xlu0.b32.start [1/16] %v670, 128
        %673 = vxpose.xlu0.b32.cont [2/16] 0.0, 128
        %674 = vxpose.xlu0.b32.cont [3/16] 0.0, 128
        %675 = vxpose.xlu0.b32.cont [4/16] 0.0, 128
        %676 = vxpose.xlu0.b32.cont [5/16] 0.0, 128
        %677 = vxpose.xlu0.b32.cont [6/16] 0.0, 128
        %678 = vxpose.xlu0.b32.cont [7/16] 0.0, 128
        %679 = vxpose.xlu0.b32.cont [8/16] 0.0, 128
        %680 = vxpose.xlu0.b32.cont [9/16] 0.0, 128
        %681 = vxpose.xlu0.b32.cont [10/16] 0.0, 128
        %682 = vxpose.xlu0.b32.cont [11/16] 0.0, 128
        %683 = vxpose.xlu0.b32.cont [12/16] 0.0, 128
        %684 = vxpose.xlu0.b32.cont [13/16] 0.0, 128
        %685 = vxpose.xlu0.b32.cont [14/16] 0.0, 128
        %686 = vxpose.xlu0.b32.cont [15/16] 0.0, 128
        %687 = vxpose.xlu0.b32.end [16/16] 0.0, 128
        %v688 = vpop.trf.xlu0
        %v689 = vpop.trf.xlu0
        %v690 = vpop.trf.xlu0
        %v691 = vpop.trf.xlu0
        %v692 = vpop.trf.xlu0
        %v693 = vpop.trf.xlu0
        %v694 = vpop.trf.xlu0
        %v695 = vpop.trf.xlu0
        %v696 = vpop.trf.xlu0
        %v697 = vpop.trf.xlu0
        %v698 = vpop.trf.xlu0
        %v699 = vpop.trf.xlu0
        %v700 = vpop.trf.xlu0
        %v701 = vpop.trf.xlu0
        %v702 = vpop.trf.xlu0
        %v703 = vpop.trf.xlu0
        %v705 = vsel %vm656, %v688, 0
        %v708 = vsel %vm656, %v689, 0
        %v711 = vsel %vm656, %v690, 0
        %v714 = vsel %vm656, %v691, 0
        %v717 = vsel %vm656, %v667, 0
        %719 = vmatprep.subr.mxu0 0.0
        %720 = vmatpush1.xpose.msra.mxu0 %v717
        %721 = vmatprep.subr.mxu0 0.0
        %722 = vmatpush1.xpose.msra.mxu0 0.0
        %723 = vmatprep.subr.mxu0 0.0
        %724 = vmatpush1.xpose.msra.mxu0 0.0
        %725 = vmatprep.subr.mxu0 0.0
        %726 = vmatpush1.xpose.msra.mxu0 0.0
        %727 = vmatprep.subr.mxu0 0.0
        %728 = vmatpush1.xpose.msra.mxu0 0.0
        %729 = vmatprep.subr.mxu0 0.0
        %730 = vmatpush1.xpose.msra.mxu0 0.0
        %731 = vmatprep.subr.mxu0 0.0
        %732 = vmatpush1.xpose.msra.mxu0 0.0
        %733 = vmatprep.subr.mxu0 0.0
        %734 = vmatpush1.xpose.msra.mxu0 0.0
        %735 = vmatprep.subr.mxu0 0.0
        %736 = vmatpush1.xpose.msra.mxu0 0.0
        %737 = vmatprep.subr.mxu0 0.0
        %738 = vmatpush1.xpose.msra.mxu0 0.0
        %739 = vmatprep.subr.mxu0 0.0
        %740 = vmatpush1.xpose.msra.mxu0 0.0
        %741 = vmatprep.subr.mxu0 0.0
        %742 = vmatpush1.xpose.msra.mxu0 0.0
        %743 = vmatprep.subr.mxu0 0.0
        %744 = vmatpush1.xpose.msra.mxu0 0.0
        %745 = vmatprep.subr.mxu0 0.0
        %746 = vmatpush1.xpose.msra.mxu0 0.0
        %747 = vmatprep.subr.mxu0 0.0
        %748 = vmatpush1.xpose.msra.mxu0 0.0
        %749 = vmatprep.subr.mxu0 0.0
        %750 = vmatpush1.xpose.msra.mxu0 0.0
        %751 = vmatprep.subr.mxu0 0.0
        %752 = vmatpush1.xpose.msra.mxu0 0.0
        %753 = vmatprep.subr.mxu0 0.0
        %754 = vmatpush1.xpose.msra.mxu0 0.0
        %755 = vmatprep.subr.mxu0 0.0
        %756 = vmatpush1.xpose.msra.mxu0 0.0
        %757 = vmatprep.subr.mxu0 0.0
        %758 = vmatpush1.xpose.msra.mxu0 0.0
        %759 = vmatprep.subr.mxu0 0.0
        %760 = vmatpush1.xpose.msra.mxu0 0.0
        %761 = vmatprep.subr.mxu0 0.0
        %762 = vmatpush1.xpose.msra.mxu0 0.0
        %763 = vmatprep.subr.mxu0 0.0
        %764 = vmatpush1.xpose.msra.mxu0 0.0
        %765 = vmatprep.subr.mxu0 0.0
        %766 = vmatpush1.xpose.msra.mxu0 0.0
        %767 = vmatprep.subr.mxu0 0.0
        %768 = vmatpush1.xpose.msra.mxu0 0.0
        %769 = vmatprep.subr.mxu0 0.0
        %770 = vmatpush1.xpose.msra.mxu0 0.0
        %771 = vmatprep.subr.mxu0 0.0
        %772 = vmatpush1.xpose.msra.mxu0 0.0
        %773 = vmatprep.subr.mxu0 0.0
        %774 = vmatpush1.xpose.msra.mxu0 0.0
        %775 = vmatprep.subr.mxu0 0.0
        %776 = vmatpush1.xpose.msra.mxu0 0.0
        %777 = vmatprep.subr.mxu0 0.0
        %778 = vmatpush1.xpose.msra.mxu0 0.0
        %779 = vmatprep.subr.mxu0 0.0
        %780 = vmatpush1.xpose.msra.mxu0 0.0
        %781 = vmatprep.subr.mxu0 0.0
        %782 = vmatpush1.xpose.msra.mxu0 0.0
        %783 = vmatprep.mubr.f32.mxu0 0.0
        %784 = vmatmul.mubr.f32.gmra.mrb[0].mxu0 %v705
        %v785 = vpop.f32.mrb[0].mxu0
        %v786 = vadd.f32 0.0, %v785
        %v787 = vpop.f32.mrb[0].mxu0
        %788 = vmatprep.mubr.f32.mxu0 0.0
        %789 = vmatmul.mubr.f32.gmra.mrb[0].mxu0 %v708
        %v790 = vpop.f32.mrb[0].mxu0
        %v791 = vadd.f32 0.0, %v790
        %v792 = vpop.f32.mrb[0].mxu0
        %793 = vmatprep.mubr.f32.mxu0 0.0
        %794 = vmatmul.mubr.f32.gmra.mrb[0].mxu0 %v711
        %v795 = vpop.f32.mrb[0].mxu0
        %v796 = vadd.f32 0.0, %v795
        %v797 = vpop.f32.mrb[0].mxu0
        %798 = vmatprep.mubr.f32.mxu0 0.0
        %799 = vmatmul.mubr.f32.gmra.mrb[0].mxu0 %v714
        %v800 = vpop.f32.mrb[0].mxu0
        %v801 = vadd.f32 0.0, %v800
        %v802 = vpop.f32.mrb[0].mxu0
        %803 = vdwg.mxu0
        %804 = vst.msk [vmem:[%s397] sm:$0xff] %vm656, %v786
        %805 = vst.msk [vmem:[%s397 + $0x8] sm:$0xff] %vm656, %v791
        %806 = vst.msk [vmem:[%s397 + $0x10] sm:$0xff] %vm656, %v796
        %807 = vst.msk [vmem:[%s397 + $0x18] sm:$0xff] %vm656, %v801
        %808 = vrot.lane.b32.xlu0 %v485, 96
        %v809 = vpop.permute.xlu0 %808
        %810 = vrot.lane.b32.xlu0 %v576, 96
        %v811 = vpop.permute.xlu0 %810
        %v812 = vsel %vm411, %v809, 0
        %v814 = vsel %vm411, %v811, 0
        %816 = vmatprep.subr.mxu0 0.0
        %817 = vmatpush1.xpose.msra.mxu0 %v814
        %818 = vmatprep.subr.mxu0 0.0
        %819 = vmatpush1.xpose.msra.mxu0 0.0
        %820 = vmatprep.subr.mxu0 0.0
        %821 = vmatpush1.xpose.msra.mxu0 0.0
        %822 = vmatprep.subr.mxu0 0.0
        %823 = vmatpush1.xpose.msra.mxu0 0.0
        %824 = vmatprep.subr.mxu0 0.0
        %825 = vmatpush1.xpose.msra.mxu0 0.0
        %826 = vmatprep.subr.mxu0 0.0
        %827 = vmatpush1.xpose.msra.mxu0 0.0
        %828 = vmatprep.subr.mxu0 0.0
        %829 = vmatpush1.xpose.msra.mxu0 0.0
        %830 = vmatprep.subr.mxu0 0.0
        %831 = vmatpush1.xpose.msra.mxu0 0.0
        %832 = vmatprep.subr.mxu0 0.0
        %833 = vmatpush1.xpose.msra.mxu0 0.0
        %834 = vmatprep.subr.mxu0 0.0
        %835 = vmatpush1.xpose.msra.mxu0 0.0
        %836 = vmatprep.subr.mxu0 0.0
        %837 = vmatpush1.xpose.msra.mxu0 0.0
        %838 = vmatprep.subr.mxu0 0.0
        %839 = vmatpush1.xpose.msra.mxu0 0.0
        %840 = vmatprep.subr.mxu0 0.0
        %841 = vmatpush1.xpose.msra.mxu0 0.0
        %842 = vmatprep.subr.mxu0 0.0
        %843 = vmatpush1.xpose.msra.mxu0 0.0
        %844 = vmatprep.subr.mxu0 0.0
        %845 = vmatpush1.xpose.msra.mxu0 0.0
        %846 = vmatprep.subr.mxu0 0.0
        %847 = vmatpush1.xpose.msra.mxu0 0.0
        %848 = vmatprep.subr.mxu0 0.0
        %849 = vmatpush1.xpose.msra.mxu0 0.0
        %850 = vmatprep.subr.mxu0 0.0
        %851 = vmatpush1.xpose.msra.mxu0 0.0
        %852 = vmatprep.subr.mxu0 0.0
        %853 = vmatpush1.xpose.msra.mxu0 0.0
        %854 = vmatprep.subr.mxu0 0.0
        %855 = vmatpush1.xpose.msra.mxu0 0.0
        %856 = vmatprep.subr.mxu0 0.0
        %857 = vmatpush1.xpose.msra.mxu0 0.0
        %858 = vmatprep.subr.mxu0 0.0
        %859 = vmatpush1.xpose.msra.mxu0 0.0
        %860 = vmatprep.subr.mxu0 0.0
        %861 = vmatpush1.xpose.msra.mxu0 0.0
        %862 = vmatprep.subr.mxu0 0.0
        %863 = vmatpush1.xpose.msra.mxu0 0.0
        %864 = vmatprep.subr.mxu0 0.0
        %865 = vmatpush1.xpose.msra.mxu0 0.0
        %866 = vmatprep.subr.mxu0 0.0
        %867 = vmatpush1.xpose.msra.mxu0 0.0
        %868 = vmatprep.subr.mxu0 0.0
        %869 = vmatpush1.xpose.msra.mxu0 0.0
        %870 = vmatprep.subr.mxu0 0.0
        %871 = vmatpush1.xpose.msra.mxu0 0.0
        %872 = vmatprep.subr.mxu0 0.0
        %873 = vmatpush1.xpose.msra.mxu0 0.0
        %874 = vmatprep.subr.mxu0 0.0
        %875 = vmatpush1.xpose.msra.mxu0 0.0
        %876 = vmatprep.subr.mxu0 0.0
        %877 = vmatpush1.xpose.msra.mxu0 0.0
        %878 = vmatprep.subr.mxu0 0.0
        %879 = vmatpush1.xpose.msra.mxu0 0.0
        %880 = vmatprep.mubr.f32.mxu0 0.0
        %881 = vmatmul.mubr.f32.gmra.mrb[0].mxu0 %v812
        %v882 = vpop.f32.mrb[0].mxu0
        %v883 = vadd.f32 0.0, %v882
        %v884 = vpop.f32.mrb[0].mxu0
        %885 = vdwg.mxu0
        %v886 = vsel %vm656, %v883, -inf
        %887 = vmax.xlane.f32.xlu0 %v886
        %v888 = vpop.xlane.xlu0 %887
        %v889 = vsub.f32 %v883, %v888
        %v890 = vmul.f32 %v889, 1.442695
        %v891 = vpow.pop %v890
        %v892 = vsel %vm656, %v891, 0.0
        %893 = vadd.xlane.f32.xlu0 %v892
        %v894 = vpop.xlane.xlu0 %893
        %v895 = vrcp.pop %v894
        %v896 = vmul.f32 %v891, %v895
        %s897 = scalar_lea.vmem %s389, 8 [#allocation10]
        %898 = vst.msk [vmem:[%s897] sm:$0xff] %vm656, %v896
        %899 = vxpose.xlu0.b32.start [1/16] %v578, 128
        %900 = vxpose.xlu0.b32.cont [2/16] 0.0, 128
        %901 = vxpose.xlu0.b32.cont [3/16] 0.0, 128
        %902 = vxpose.xlu0.b32.cont [4/16] 0.0, 128
        %903 = vxpose.xlu0.b32.cont [5/16] 0.0, 128
        %904 = vxpose.xlu0.b32.cont [6/16] 0.0, 128
        %905 = vxpose.xlu0.b32.cont [7/16] 0.0, 128
        %906 = vxpose.xlu0.b32.cont [8/16] 0.0, 128
        %907 = vxpose.xlu0.b32.cont [9/16] 0.0, 128
        %908 = vxpose.xlu0.b32.cont [10/16] 0.0, 128
        %909 = vxpose.xlu0.b32.cont [11/16] 0.0, 128
        %910 = vxpose.xlu0.b32.cont [12/16] 0.0, 128
        %911 = vxpose.xlu0.b32.cont [13/16] 0.0, 128
        %912 = vxpose.xlu0.b32.cont [14/16] 0.0, 128
        %913 = vxpose.xlu0.b32.cont [15/16] 0.0, 128
        %914 = vxpose.xlu0.b32.end [16/16] 0.0, 128
        %v915 = vpop.trf.xlu0
        %v916 = vpop.trf.xlu0
        %v917 = vpop.trf.xlu0
        %v918 = vpop.trf.xlu0
        %v919 = vpop.trf.xlu0
        %v920 = vpop.trf.xlu0
        %v921 = vpop.trf.xlu0
        %v922 = vpop.trf.xlu0
        %v923 = vpop.trf.xlu0
        %v924 = vpop.trf.xlu0
        %v925 = vpop.trf.xlu0
        %v926 = vpop.trf.xlu0
        %v927 = vpop.trf.xlu0
        %v928 = vpop.trf.xlu0
        %v929 = vpop.trf.xlu0
        %v930 = vpop.trf.xlu0
        %v932 = vsel %vm656, %v915, 0
        %v935 = vsel %vm656, %v916, 0
        %v938 = vsel %vm656, %v917, 0
        %v941 = vsel %vm656, %v918, 0
        %v944 = vsel %vm656, %v896, 0
        %946 = vmatprep.subr.mxu0 0.0
        %947 = vmatpush1.xpose.msra.mxu0 %v944
        %948 = vmatprep.subr.mxu0 0.0
        %949 = vmatpush1.xpose.msra.mxu0 0.0
        %950 = vmatprep.subr.mxu0 0.0
        %951 = vmatpush1.xpose.msra.mxu0 0.0
        %952 = vmatprep.subr.mxu0 0.0
        %953 = vmatpush1.xpose.msra.mxu0 0.0
        %954 = vmatprep.subr.mxu0 0.0
        %955 = vmatpush1.xpose.msra.mxu0 0.0
        %956 = vmatprep.subr.mxu0 0.0
        %957 = vmatpush1.xpose.msra.mxu0 0.0
        %958 = vmatprep.subr.mxu0 0.0
        %959 = vmatpush1.xpose.msra.mxu0 0.0
        %960 = vmatprep.subr.mxu0 0.0
        %961 = vmatpush1.xpose.msra.mxu0 0.0
        %962 = vmatprep.subr.mxu0 0.0
        %963 = vmatpush1.xpose.msra.mxu0 0.0
        %964 = vmatprep.subr.mxu0 0.0
        %965 = vmatpush1.xpose.msra.mxu0 0.0
        %966 = vmatprep.subr.mxu0 0.0
        %967 = vmatpush1.xpose.msra.mxu0 0.0
        %968 = vmatprep.subr.mxu0 0.0
        %969 = vmatpush1.xpose.msra.mxu0 0.0
        %970 = vmatprep.subr.mxu0 0.0
        %971 = vmatpush1.xpose.msra.mxu0 0.0
        %972 = vmatprep.subr.mxu0 0.0
        %973 = vmatpush1.xpose.msra.mxu0 0.0
        %974 = vmatprep.subr.mxu0 0.0
        %975 = vmatpush1.xpose.msra.mxu0 0.0
        %976 = vmatprep.subr.mxu0 0.0
        %977 = vmatpush1.xpose.msra.mxu0 0.0
        %978 = vmatprep.subr.mxu0 0.0
        %979 = vmatpush1.xpose.msra.mxu0 0.0
        %980 = vmatprep.subr.mxu0 0.0
        %981 = vmatpush1.xpose.msra.mxu0 0.0
        %982 = vmatprep.subr.mxu0 0.0
        %983 = vmatpush1.xpose.msra.mxu0 0.0
        %984 = vmatprep.subr.mxu0 0.0
        %985 = vmatpush1.xpose.msra.mxu0 0.0
        %986 = vmatprep.subr.mxu0 0.0
        %987 = vmatpush1.xpose.msra.mxu0 0.0
        %988 = vmatprep.subr.mxu0 0.0
        %989 = vmatpush1.xpose.msra.mxu0 0.0
        %990 = vmatprep.subr.mxu0 0.0
        %991 = vmatpush1.xpose.msra.mxu0 0.0
        %992 = vmatprep.subr.mxu0 0.0
        %993 = vmatpush1.xpose.msra.mxu0 0.0
        %994 = vmatprep.subr.mxu0 0.0
        %995 = vmatpush1.xpose.msra.mxu0 0.0
        %996 = vmatprep.subr.mxu0 0.0
        %997 = vmatpush1.xpose.msra.mxu0 0.0
        %998 = vmatprep.subr.mxu0 0.0
        %999 = vmatpush1.xpose.msra.mxu0 0.0
        %1000 = vmatprep.subr.mxu0 0.0
        %1001 = vmatpush1.xpose.msra.mxu0 0.0
        %1002 = vmatprep.subr.mxu0 0.0
        %1003 = vmatpush1.xpose.msra.mxu0 0.0
        %1004 = vmatprep.subr.mxu0 0.0
        %1005 = vmatpush1.xpose.msra.mxu0 0.0
        %1006 = vmatprep.subr.mxu0 0.0
        %1007 = vmatpush1.xpose.msra.mxu0 0.0
        %1008 = vmatprep.subr.mxu0 0.0
        %1009 = vmatpush1.xpose.msra.mxu0 0.0
        %1010 = vmatprep.mubr.f32.mxu0 0.0
        %1011 = vmatmul.mubr.f32.gmra.mrb[0].mxu0 %v932
        %v1012 = vpop.f32.mrb[0].mxu0
        %v1013 = vadd.f32 0.0, %v1012
        %v1014 = vpop.f32.mrb[0].mxu0
        %1015 = vmatprep.mubr.f32.mxu0 0.0
        %1016 = vmatmul.mubr.f32.gmra.mrb[0].mxu0 %v935
        %v1017 = vpop.f32.mrb[0].mxu0
        %v1018 = vadd.f32 0.0, %v1017
        %v1019 = vpop.f32.mrb[0].mxu0
        %1020 = vmatprep.mubr.f32.mxu0 0.0
        %1021 = vmatmul.mubr.f32.gmra.mrb[0].mxu0 %v938
        %v1022 = vpop.f32.mrb[0].mxu0
        %v1023 = vadd.f32 0.0, %v1022
        %v1024 = vpop.f32.mrb[0].mxu0
        %1025 = vmatprep.mubr.f32.mxu0 0.0
        %1026 = vmatmul.mubr.f32.gmra.mrb[0].mxu0 %v941
        %v1027 = vpop.f32.mrb[0].mxu0
        %v1028 = vadd.f32 0.0, %v1027
        %v1029 = vpop.f32.mrb[0].mxu0
        %1030 = vdwg.mxu0
        %s1031 = scalar_lea.vmem %s397, 32
        %1032 = vst.msk [vmem:[%s1031] sm:$0xff] %vm656, %v1013
        %1033 = vst.msk [vmem:[%s1031 + $0x8] sm:$0xff] %vm656, %v1018
        %1034 = vst.msk [vmem:[%s1031 + $0x10] sm:$0xff] %vm656, %v1023
        %1035 = vst.msk [vmem:[%s1031 + $0x18] sm:$0xff] %vm656, %v1028
        %1036 = vrot.lane.b32.xlu0 %v485, 64
        %v1037 = vpop.permute.xlu0 %1036
        %1038 = vrot.lane.b32.xlu0 %v576, 64
        %v1039 = vpop.permute.xlu0 %1038
        %v1040 = vsel %vm411, %v1037, 0
        %v1042 = vsel %vm411, %v1039, 0
        %1044 = vmatprep.subr.mxu0 0.0
        %1045 = vmatpush1.xpose.msra.mxu0 %v1042
        %1046 = vmatprep.subr.mxu0 0.0
        %1047 = vmatpush1.xpose.msra.mxu0 0.0
        %1048 = vmatprep.subr.mxu0 0.0
        %1049 = vmatpush1.xpose.msra.mxu0 0.0
        %1050 = vmatprep.subr.mxu0 0.0
        %1051 = vmatpush1.xpose.msra.mxu0 0.0
        %1052 = vmatprep.subr.mxu0 0.0
        %1053 = vmatpush1.xpose.msra.mxu0 0.0
        %1054 = vmatprep.subr.mxu0 0.0
        %1055 = vmatpush1.xpose.msra.mxu0 0.0
        %1056 = vmatprep.subr.mxu0 0.0
        %1057 = vmatpush1.xpose.msra.mxu0 0.0
        %1058 = vmatprep.subr.mxu0 0.0
        %1059 = vmatpush1.xpose.msra.mxu0 0.0
        %1060 = vmatprep.subr.mxu0 0.0
        %1061 = vmatpush1.xpose.msra.mxu0 0.0
        %1062 = vmatprep.subr.mxu0 0.0
        %1063 = vmatpush1.xpose.msra.mxu0 0.0
        %1064 = vmatprep.subr.mxu0 0.0
        %1065 = vmatpush1.xpose.msra.mxu0 0.0
        %1066 = vmatprep.subr.mxu0 0.0
        %1067 = vmatpush1.xpose.msra.mxu0 0.0
        %1068 = vmatprep.subr.mxu0 0.0
        %1069 = vmatpush1.xpose.msra.mxu0 0.0
        %1070 = vmatprep.subr.mxu0 0.0
        %1071 = vmatpush1.xpose.msra.mxu0 0.0
        %1072 = vmatprep.subr.mxu0 0.0
        %1073 = vmatpush1.xpose.msra.mxu0 0.0
        %1074 = vmatprep.subr.mxu0 0.0
        %1075 = vmatpush1.xpose.msra.mxu0 0.0
        %1076 = vmatprep.subr.mxu0 0.0
        %1077 = vmatpush1.xpose.msra.mxu0 0.0
        %1078 = vmatprep.subr.mxu0 0.0
        %1079 = vmatpush1.xpose.msra.mxu0 0.0
        %1080 = vmatprep.subr.mxu0 0.0
        %1081 = vmatpush1.xpose.msra.mxu0 0.0
        %1082 = vmatprep.subr.mxu0 0.0
        %1083 = vmatpush1.xpose.msra.mxu0 0.0
        %1084 = vmatprep.subr.mxu0 0.0
        %1085 = vmatpush1.xpose.msra.mxu0 0.0
        %1086 = vmatprep.subr.mxu0 0.0
        %1087 = vmatpush1.xpose.msra.mxu0 0.0
        %1088 = vmatprep.subr.mxu0 0.0
        %1089 = vmatpush1.xpose.msra.mxu0 0.0
        %1090 = vmatprep.subr.mxu0 0.0
        %1091 = vmatpush1.xpose.msra.mxu0 0.0
        %1092 = vmatprep.subr.mxu0 0.0
        %1093 = vmatpush1.xpose.msra.mxu0 0.0
        %1094 = vmatprep.subr.mxu0 0.0
        %1095 = vmatpush1.xpose.msra.mxu0 0.0
        %1096 = vmatprep.subr.mxu0 0.0
        %1097 = vmatpush1.xpose.msra.mxu0 0.0
        %1098 = vmatprep.subr.mxu0 0.0
        %1099 = vmatpush1.xpose.msra.mxu0 0.0
        %1100 = vmatprep.subr.mxu0 0.0
        %1101 = vmatpush1.xpose.msra.mxu0 0.0
        %1102 = vmatprep.subr.mxu0 0.0
        %1103 = vmatpush1.xpose.msra.mxu0 0.0
        %1104 = vmatprep.subr.mxu0 0.0
        %1105 = vmatpush1.xpose.msra.mxu0 0.0
        %1106 = vmatprep.subr.mxu0 0.0
        %1107 = vmatpush1.xpose.msra.mxu0 0.0
        %1108 = vmatprep.mubr.f32.mxu0 0.0
        %1109 = vmatmul.mubr.f32.gmra.mrb[0].mxu0 %v1040
        %v1110 = vpop.f32.mrb[0].mxu0
        %v1111 = vadd.f32 0.0, %v1110
        %v1112 = vpop.f32.mrb[0].mxu0
        %1113 = vdwg.mxu0
        %v1114 = vsel %vm656, %v1111, -inf
        %1115 = vmax.xlane.f32.xlu0 %v1114
        %v1116 = vpop.xlane.xlu0 %1115
        %v1117 = vsub.f32 %v1111, %v1116
        %v1118 = vmul.f32 %v1117, 1.442695
        %v1119 = vpow.pop %v1118
        %v1120 = vsel %vm656, %v1119, 0.0
        %1121 = vadd.xlane.f32.xlu0 %v1120
        %v1122 = vpop.xlane.xlu0 %1121
        %v1123 = vrcp.pop %v1122
        %v1124 = vmul.f32 %v1119, %v1123
        %s1125 = scalar_lea.vmem %s389, 16 [#allocation10]
        %1126 = vst.msk [vmem:[%s1125] sm:$0xff] %vm656, %v1124
        %1128 = vrot.lane.b32.xlu0 %v578, 96
        %v1129 = vpop.permute.xlu0 %1128
        %1131 = vxpose.xlu0.b32.start [1/16] %v1129, 128
        %1132 = vxpose.xlu0.b32.cont [2/16] 0.0, 128
        %1133 = vxpose.xlu0.b32.cont [3/16] 0.0, 128
        %1134 = vxpose.xlu0.b32.cont [4/16] 0.0, 128
        %1135 = vxpose.xlu0.b32.cont [5/16] 0.0, 128
        %1136 = vxpose.xlu0.b32.cont [6/16] 0.0, 128
        %1137 = vxpose.xlu0.b32.cont [7/16] 0.0, 128
        %1138 = vxpose.xlu0.b32.cont [8/16] 0.0, 128
        %1139 = vxpose.xlu0.b32.cont [9/16] 0.0, 128
        %1140 = vxpose.xlu0.b32.cont [10/16] 0.0, 128
        %1141 = vxpose.xlu0.b32.cont [11/16] 0.0, 128
        %1142 = vxpose.xlu0.b32.cont [12/16] 0.0, 128
        %1143 = vxpose.xlu0.b32.cont [13/16] 0.0, 128
        %1144 = vxpose.xlu0.b32.cont [14/16] 0.0, 128
        %1145 = vxpose.xlu0.b32.cont [15/16] 0.0, 128
        %1146 = vxpose.xlu0.b32.end [16/16] 0.0, 128
        %v1147 = vpop.trf.xlu0
        %v1148 = vpop.trf.xlu0
        %v1149 = vpop.trf.xlu0
        %v1150 = vpop.trf.xlu0
        %v1151 = vpop.trf.xlu0
        %v1152 = vpop.trf.xlu0
        %v1153 = vpop.trf.xlu0
        %v1154 = vpop.trf.xlu0
        %v1155 = vpop.trf.xlu0
        %v1156 = vpop.trf.xlu0
        %v1157 = vpop.trf.xlu0
        %v1158 = vpop.trf.xlu0
        %v1159 = vpop.trf.xlu0
        %v1160 = vpop.trf.xlu0
        %v1161 = vpop.trf.xlu0
        %v1162 = vpop.trf.xlu0
        %v1164 = vsel %vm656, %v1147, 0
        %v1167 = vsel %vm656, %v1148, 0
        %v1170 = vsel %vm656, %v1149, 0
        %v1173 = vsel %vm656, %v1150, 0
        %v1176 = vsel %vm656, %v1124, 0
        %1178 = vmatprep.subr.mxu0 0.0
        %1179 = vmatpush1.xpose.msra.mxu0 %v1176
        %1180 = vmatprep.subr.mxu0 0.0
        %1181 = vmatpush1.xpose.msra.mxu0 0.0
        %1182 = vmatprep.subr.mxu0 0.0
        %1183 = vmatpush1.xpose.msra.mxu0 0.0
        %1184 = vmatprep.subr.mxu0 0.0
        %1185 = vmatpush1.xpose.msra.mxu0 0.0
        %1186 = vmatprep.subr.mxu0 0.0
        %1187 = vmatpush1.xpose.msra.mxu0 0.0
        %1188 = vmatprep.subr.mxu0 0.0
        %1189 = vmatpush1.xpose.msra.mxu0 0.0
        %1190 = vmatprep.subr.mxu0 0.0
        %1191 = vmatpush1.xpose.msra.mxu0 0.0
        %1192 = vmatprep.subr.mxu0 0.0
        %1193 = vmatpush1.xpose.msra.mxu0 0.0
        %1194 = vmatprep.subr.mxu0 0.0
        %1195 = vmatpush1.xpose.msra.mxu0 0.0
        %1196 = vmatprep.subr.mxu0 0.0
        %1197 = vmatpush1.xpose.msra.mxu0 0.0
        %1198 = vmatprep.subr.mxu0 0.0
        %1199 = vmatpush1.xpose.msra.mxu0 0.0
        %1200 = vmatprep.subr.mxu0 0.0
        %1201 = vmatpush1.xpose.msra.mxu0 0.0
        %1202 = vmatprep.subr.mxu0 0.0
        %1203 = vmatpush1.xpose.msra.mxu0 0.0
        %1204 = vmatprep.subr.mxu0 0.0
        %1205 = vmatpush1.xpose.msra.mxu0 0.0
        %1206 = vmatprep.subr.mxu0 0.0
        %1207 = vmatpush1.xpose.msra.mxu0 0.0
        %1208 = vmatprep.subr.mxu0 0.0
        %1209 = vmatpush1.xpose.msra.mxu0 0.0
        %1210 = vmatprep.subr.mxu0 0.0
        %1211 = vmatpush1.xpose.msra.mxu0 0.0
        %1212 = vmatprep.subr.mxu0 0.0
        %1213 = vmatpush1.xpose.msra.mxu0 0.0
        %1214 = vmatprep.subr.mxu0 0.0
        %1215 = vmatpush1.xpose.msra.mxu0 0.0
        %1216 = vmatprep.subr.mxu0 0.0
        %1217 = vmatpush1.xpose.msra.mxu0 0.0
        %1218 = vmatprep.subr.mxu0 0.0
        %1219 = vmatpush1.xpose.msra.mxu0 0.0
        %1220 = vmatprep.subr.mxu0 0.0
        %1221 = vmatpush1.xpose.msra.mxu0 0.0
        %1222 = vmatprep.subr.mxu0 0.0
        %1223 = vmatpush1.xpose.msra.mxu0 0.0
        %1224 = vmatprep.subr.mxu0 0.0
        %1225 = vmatpush1.xpose.msra.mxu0 0.0
        %1226 = vmatprep.subr.mxu0 0.0
        %1227 = vmatpush1.xpose.msra.mxu0 0.0
        %1228 = vmatprep.subr.mxu0 0.0
        %1229 = vmatpush1.xpose.msra.mxu0 0.0
        %1230 = vmatprep.subr.mxu0 0.0
        %1231 = vmatpush1.xpose.msra.mxu0 0.0
        %1232 = vmatprep.subr.mxu0 0.0
        %1233 = vmatpush1.xpose.msra.mxu0 0.0
        %1234 = vmatprep.subr.mxu0 0.0
        %1235 = vmatpush1.xpose.msra.mxu0 0.0
        %1236 = vmatprep.subr.mxu0 0.0
        %1237 = vmatpush1.xpose.msra.mxu0 0.0
        %1238 = vmatprep.subr.mxu0 0.0
        %1239 = vmatpush1.xpose.msra.mxu0 0.0
        %1240 = vmatprep.subr.mxu0 0.0
        %1241 = vmatpush1.xpose.msra.mxu0 0.0
        %1242 = vmatprep.mubr.f32.mxu0 0.0
        %1243 = vmatmul.mubr.f32.gmra.mrb[0].mxu0 %v1164
        %v1244 = vpop.f32.mrb[0].mxu0
        %v1245 = vadd.f32 0.0, %v1244
        %v1246 = vpop.f32.mrb[0].mxu0
        %1247 = vmatprep.mubr.f32.mxu0 0.0
        %1248 = vmatmul.mubr.f32.gmra.mrb[0].mxu0 %v1167
        %v1249 = vpop.f32.mrb[0].mxu0
        %v1250 = vadd.f32 0.0, %v1249
        %v1251 = vpop.f32.mrb[0].mxu0
        %1252 = vmatprep.mubr.f32.mxu0 0.0
        %1253 = vmatmul.mubr.f32.gmra.mrb[0].mxu0 %v1170
        %v1254 = vpop.f32.mrb[0].mxu0
        %v1255 = vadd.f32 0.0, %v1254
        %v1256 = vpop.f32.mrb[0].mxu0
        %1257 = vmatprep.mubr.f32.mxu0 0.0
        %1258 = vmatmul.mubr.f32.gmra.mrb[0].mxu0 %v1173
        %v1259 = vpop.f32.mrb[0].mxu0
        %v1260 = vadd.f32 0.0, %v1259
        %v1261 = vpop.f32.mrb[0].mxu0
        %1262 = vdwg.mxu0
        %s1263 = scalar_lea.vmem %s397, 64
        %1264 = vst.msk [vmem:[%s1263] sm:$0xff] %vm656, %v1245
        %1265 = vst.msk [vmem:[%s1263 + $0x8] sm:$0xff] %vm656, %v1250
        %1266 = vst.msk [vmem:[%s1263 + $0x10] sm:$0xff] %vm656, %v1255
        %1267 = vst.msk [vmem:[%s1263 + $0x18] sm:$0xff] %vm656, %v1260
        %p1268 = scmp.lt.s32.totalorder %s33, 1
        %s1269 = scalar_select %p1268, %s33, 1
        %p1270 = scmp.lt.s32.totalorder %s34, 0
        %s1271 = scalar_select %p1270, %s34, 0
        %s1272 = smul.addr %s1269, 12
        %s1273 = sadd.s32 %s1271, %s1272
        %s1274 = smul.addr %s1273, 8
        %s1275 = scalar_lea.vmem %s6, %s1274
        %s1276 = sand.u32 %s217, 1
        %s1277 = scalar_lea.sflag [#allocation4], %s1276
        %s1278 = sand.u32 %s217, 1
        %s1279 = smul.addr %s1278, 24
        %s1280 = scalar_lea.vmem [#allocation10], %s1279
        // Predicated region
        $region61: #{tpu_custom_call.1} parent=43 // pred_check
          %p1281 = pneg %p199
        $region62: #{tpu_custom_call.1} parent=43 // pred_check_branch
          %1283 = sbr.rel (%p1281) target = $region64
        $region63: #{tpu_custom_call.1} parent=43 // pred_region
          _
        $region64: #{tpu_custom_call.1} parent=43 // pred_fallthru
          _
        // Predicated region
        $region65: #{tpu_custom_call.1} parent=43 // pred_check
          %p1284 = pneg %p227
        $region66: #{tpu_custom_call.1} parent=43 // pred_check_branch
          %1286 = sbr.rel (%p1284) target = $region68
        $region67: #{tpu_custom_call.1} parent=43 // pred_region
          %s1288 = ssub.s32 384, 384
          %1289 = vsyncadd %s1277, %s1288
          %s1290 = smul.addr %s33, 3
          %s1291 = sadd.s32 %s34, %s1290
          %s1292 = smul.addr %s1291, 128
          %s1293 = scalar_lea.hbm %s7, %s1292
          %s1294 = sshll.u32 %s1280, 4
          %s1295 = int_to_ptr.vmem [resolvable:$true] %s1294
          %1300 = dma.vmem_to_hbm [thread:$0]  %s1295, 384, %s1293, %s1277, 128, 128, 8
        $region68: #{tpu_custom_call.1} parent=43 // pred_fallthru
          _
      $region44: #{tpu_custom_call.1} parent=5 // pred_fallthru
        _
      %p1301 = scmp.le.s32.totalorder 2, %s24
      // Predicated region
      $region69: #{tpu_custom_call.1} parent=5 // pred_check
        %p1302 = pneg %p1301
      $region70: #{tpu_custom_call.1} parent=5 // pred_check_branch
        %1304 = sbr.rel (%p1302) target = $region72
      $region71: #{tpu_custom_call.1} parent=5 // pred_region
        %s1305 = ssub.s32 %s24, 2
        // Predicated region
        $region73: #{tpu_custom_call.1} parent=71 // pred_check
          %p1306 = pneg %p205
        $region74: #{tpu_custom_call.1} parent=71 // pred_check_branch
          %1308 = sbr.rel (%p1306) target = $region76
        $region75: #{tpu_custom_call.1} parent=71 // pred_region
          %p1309 = scmp.lt.s32.totalorder %s35, 1
          %s1310 = scalar_select %p1309, %s35, 1
          %p1311 = scmp.lt.s32.totalorder %s36, 0
          %s1312 = scalar_select %p1311, %s36, 0
          %s1313 = smul.addr %s1310, 12
          %s1314 = sadd.s32 %s1312, %s1313
          %s1315 = smul.addr %s1314, 8
          %s1316 = scalar_lea.vmem %s6, %s1315
        $region76: #{tpu_custom_call.1} parent=71 // pred_fallthru
          _
        // Predicated region
        $region77: #{tpu_custom_call.1} parent=71 // pred_check
          %p1317 = pneg %p233
        $region78: #{tpu_custom_call.1} parent=71 // pred_check_branch
          %1319 = sbr.rel (%p1317) target = $region80
        $region79: #{tpu_custom_call.1} parent=71 // pred_region
          %s1320 = sand.u32 %s218, 1
          %s1321 = scalar_lea.sflag [#allocation4], %s1320
          %s1322 = sand.u32 %s218, 1
          %s1323 = smul.addr %s1322, 24
          %s1324 = scalar_lea.vmem [#allocation10], %s1323
          %1325 = dma.done %s1321, 384
        $region80: #{tpu_custom_call.1} parent=71 // pred_fallthru
          _
      $region72: #{tpu_custom_call.1} parent=5 // pred_fallthru
        _
    $region6: #{tpu_custom_call.1} parent=1 // loop_footer
      %s28 = sadd.s32 1, %s24
    $region7: #{tpu_custom_call.1} parent=1 // loop_footer_branch
      %23 = sbr.rel target = $region3
    $region8: #{tpu_custom_call.1} parent=1 // loop_exit
      _
    %1326 = vsyncpa [#allocation3], 1
    %s1327 = scalar_lea.sflag [#allocation3], 1
    %1328 = vsyncpa %s1327, 1
    %1329 = vsyncpa [#allocation6], 1
    %s1330 = scalar_lea.sflag [#allocation6], 1
    %1331 = vsyncpa %s1330, 1
    %1332 = vsyncpa [#allocation9], 1
    %1333 = vsyncpa [#allocation4], 1
    %s1334 = scalar_lea.sflag [#allocation4], 1
    %1335 = vsyncpa %s1334, 1

</llo_original>
